<compile_context>
chip_gen: v7x
topology: tpu7x:2x2x1
jax: 0.10.0
libtpu: 0.0.40
codegen_flags: <defaults>
</compile_context>

<pallas_src>
import jax
import jax.numpy as jnp
from jax import lax
from jax.experimental import pallas as pl
from jax.experimental.pallas import tpu as pltpu


def graph_pool_kernel(atoms_ref, edges_ref, out_ref):
    TB, A, F = atoms_ref.shape
    DA = edges_ref.shape[1]
    D = DA // A

    atoms = atoms_ref[...]                      # (TB, A, F)
    idx = edges_ref[...]                        # (TB, D*A, 1) int32, row k = d*A + i
    valid = idx != -1                           # reused for -inf mask AND degree mask

    # Block-local one-hot selector (no cross-molecule offsets -> O(TB), not O(TB^2)).
    j_ids = lax.broadcasted_iota(jnp.int32, (TB, DA, A), 2)
    sel = (j_ids == idx).astype(atoms.dtype)    # (TB, D*A, A); bf16-safe (one-hot x bf16 exact)

    # One batched MXU contraction gathers every (degree-slot, atom) neighbor row.
    gathered = jnp.einsum("bka,baf->bkf", sel, atoms,
                          preferred_element_type=jnp.float32)    # (TB, D*A, F) f32
    gathered = jnp.where(valid, gathered, jnp.float32(-jnp.inf))  # missing -> -inf

    # include_self=True: the atom's own features always participate in the max.
    result = atoms.astype(jnp.float32)
    deg_nonzero = valid[:, 0:A, :]
    for d in range(D):                          # D is tiny & static -> unrolled, full-width ops
        result = jnp.maximum(result, gathered[:, d * A:(d + 1) * A, :])
        if d > 0:
            deg_nonzero = jnp.logical_or(deg_nonzero, valid[:, d * A:(d + 1) * A, :])

    # Degree-0 atoms -> 0 (jnp.where avoids the 0 * inf -> NaN hazard of the torch mul).
    result = jnp.where(deg_nonzero, result, jnp.float32(0.0))
    out_ref[...] = result.astype(out_ref.dtype)  # single full-block store


def _multi_tensorcore():
    """True on chips whose TensorCores share one Pallas grid (v7x, v4/v5p megacore)."""
    try:
        kind = jax.devices()[0].device_kind.lower().replace(" ", "")
    except Exception:
        return False
    return any(tag in kind for tag in ("v7", "7x", "v4", "v5p"))


def _pick_tile_b(B, tb_max=32):
    """Generation-aware molecules-per-grid-step.

    Single-TC chips (v5e/v6e): one grid step (splitting only pays ~0.35us/step
    overhead). Multi-core chips: 2 steps so each core gets one block. tb is capped
    (VMEM: selector + gathered + double-buffered blocks are ~0.25 MiB per molecule,
    so tb<=32 stays far below the 16/32 MiB scoped defaults and v7x's 64 MiB physical).
    """
    steps = 2 if (_multi_tensorcore() and B % 2 == 0 and B >= 2) else 1
    target = max(1, min(B // steps, tb_max))
    for cand in range(target, 0, -1):
        if B % cand == 0:
            return cand
    return 1


def graph_pool(atoms, edges, tile_b=None):
    B, A, F = atoms.shape
    _, _, D = edges.shape
    tb = _pick_tile_b(B) if tile_b is None else tile_b
    assert B % tb == 0, "tile_b must divide the batch"

    # Wrapper-side (free in XLA): put the neighbor indices in the sublane-major
    # (B, D*A, 1) layout the block-local selector needs, row k = d*A + i.
    edges_k = jnp.transpose(edges.astype(jnp.int32), (0, 2, 1)).reshape(B, D * A, 1)

    return pl.pallas_call(
        graph_pool_kernel,
        out_shape=jax.ShapeDtypeStruct((B, A, F), atoms.dtype),
        grid=(B // tb,),
        in_specs=[
            pl.BlockSpec((tb, A, F), lambda g: (g, 0, 0)),
            pl.BlockSpec((tb, D * A, 1), lambda g: (g, 0, 0)),
        ],
        out_specs=pl.BlockSpec((tb, A, F), lambda g: (g, 0, 0)),
        compiler_params=pltpu.CompilerParams(
            dimension_semantics=("parallel",)),
    )(atoms, edges_k)


def graph_pool_ref(atoms, edges):
    """Pure-JAX reference matching the PyTorch GraphPool semantics."""
    def one(a, e):  # a: (A, F), e: (A, D)
        A, F = a.shape
        padded = jnp.concatenate(
            [jnp.full((1, F), -jnp.inf, a.dtype), a], axis=0)       # row 0 = -inf pad
        nbrs = padded[e + 1]                                        # (A, D, F) gather
        all_feats = jnp.concatenate([a[:, None, :], nbrs], axis=1)  # include_self
        max_f = jnp.max(all_feats, axis=1)                          # (A, F)
        deg = jnp.sum((e != -1).astype(jnp.int32), axis=-1, keepdims=True)
        return jnp.where(deg != 0, max_f, 0.0).astype(a.dtype)
    return jax.vmap(one)(atoms, edges)


if __name__ == "__main__":
    B, A, D, F = 8, 16, 4, 32
    key = jax.random.PRNGKey(0)
    k_atoms, k_edges = jax.random.split(key)

    atoms = jax.random.normal(k_atoms, (B, A, F), dtype=jnp.float32)
    # edges in [-1, A-1]; -1 marks a missing neighbor slot
    edges = jax.random.randint(k_edges, (B, A, D), -1, A, dtype=jnp.int32)
    # force a couple of degree-0 atoms to exercise the zeroing path
    edges = edges.at[0, 3, :].set(-1)
    edges = edges.at[5, 7, :].set(-1)

    out = graph_pool(atoms, edges)
    jax.block_until_ready(out)

    ref = graph_pool_ref(atoms, edges)
    assert out.shape == (B, A, F)
    assert jnp.allclose(out, ref, atol=1e-5, rtol=1e-5), "mismatch vs reference"

    print("KERNEL_OK")
</pallas_src>

<mosaic_0001>
module attributes {stable_mosaic.version = 11 : i64} {
  func.func @graph_pool_kernel(%arg0: i32, %arg1: memref<8x16x32xf32, #tpu.memory_space<vmem>>, %arg2: memref<8x64x1xi32, #tpu.memory_space<vmem>>, %arg3: memref<8x16x32xf32, #tpu.memory_space<vmem>>) attributes {dimension_semantics = [#tpu.dimension_semantics<parallel>], iteration_bounds = array<i64: 1>, scalar_prefetch = 0 : i64, scratch_operands = 0 : i64, tpu.core_type = #tpu.core_type<tc>, window_params = [{transform_indices = @transform_0, window_bounds = array<i64: 8, 16, 32>}, {transform_indices = @transform_1, window_bounds = array<i64: 8, 64, 1>}, {transform_indices = @transform_2, window_bounds = array<i64: 8, 16, 32>}]} {
    %c0 = arith.constant 0 : index
    %c0_0 = arith.constant 0 : index
    %c0_1 = arith.constant 0 : index
    %0 = vector.load %arg1[%c0, %c0_0, %c0_1] : memref<8x16x32xf32, #tpu.memory_space<vmem>>, vector<8x16x32xf32>
    %c0_2 = arith.constant 0 : index
    %c0_3 = arith.constant 0 : index
    %c0_4 = arith.constant 0 : index
    %1 = vector.load %arg2[%c0_2, %c0_3, %c0_4] : memref<8x64x1xi32, #tpu.memory_space<vmem>>, vector<8x64x1xi32>
    %c-1_i32 = arith.constant -1 : i32
    %2 = vector.broadcast %c-1_i32 : i32 to vector<8x64x1xi32>
    %3 = arith.cmpi ne, %1, %2 : vector<8x64x1xi32>
    %4 = tpu.iota {dimensions = array<i32: 2>} : vector<8x64x16xi32>
    %5 = vector.broadcast %1 : vector<8x64x1xi32> to vector<8x64x16xi32>
    %6 = arith.cmpi eq, %4, %5 : vector<8x64x16xi32>
    %7 = arith.extui %6 : vector<8x64x16xi1> to vector<8x64x16xi32>
    %8 = arith.sitofp %7 : vector<8x64x16xi32> to vector<8x64x16xf32>
    "tpu.trace_start"() <{level = 10 : i32, message = "bka,baf->bkf"}> : () -> ()
    %cst = arith.constant dense<0.000000e+00> : vector<8x64x32xf32>
    %9 = tpu.matmul %8, %0, %cst {dimension_numbers = #tpu.dot_dimension_numbers<[2], [1], [1], [2], [0, 0, 0, 1, 1, 2], [0], [0]>} : vector<8x64x16xf32>, vector<8x16x32xf32>, vector<8x64x32xf32> -> vector<8x64x32xf32>
    %cst_5 = arith.constant 0xFF800000 : f32
    "tpu.trace_stop"() : () -> ()
    %10 = vector.shape_cast %3 : vector<8x64x1xi1> to vector<8x64x1xi1>
    %11 = vector.broadcast %10 : vector<8x64x1xi1> to vector<8x64x32xi1>
    %12 = vector.broadcast %cst_5 : f32 to vector<8x64x32xf32>
    %13 = arith.select %11, %9, %12 : vector<8x64x32xi1>, vector<8x64x32xf32>
    %14 = vector.extract_strided_slice %3 {offsets = [0, 0, 0], sizes = [8, 16, 1], strides = [1, 1, 1]} : vector<8x64x1xi1> to vector<8x16x1xi1>
    %15 = vector.extract_strided_slice %13 {offsets = [0, 0, 0], sizes = [8, 16, 32], strides = [1, 1, 1]} : vector<8x64x32xf32> to vector<8x16x32xf32>
    %16 = arith.maximumf %0, %15 : vector<8x16x32xf32>
    %17 = vector.extract_strided_slice %13 {offsets = [0, 16, 0], sizes = [8, 16, 32], strides = [1, 1, 1]} : vector<8x64x32xf32> to vector<8x16x32xf32>
    %18 = arith.maximumf %16, %17 : vector<8x16x32xf32>
    %19 = vector.extract_strided_slice %3 {offsets = [0, 16, 0], sizes = [8, 16, 1], strides = [1, 1, 1]} : vector<8x64x1xi1> to vector<8x16x1xi1>
    %20 = arith.ori %14, %19 : vector<8x16x1xi1>
    %21 = vector.extract_strided_slice %13 {offsets = [0, 32, 0], sizes = [8, 16, 32], strides = [1, 1, 1]} : vector<8x64x32xf32> to vector<8x16x32xf32>
    %22 = arith.maximumf %18, %21 : vector<8x16x32xf32>
    %23 = vector.extract_strided_slice %3 {offsets = [0, 32, 0], sizes = [8, 16, 1], strides = [1, 1, 1]} : vector<8x64x1xi1> to vector<8x16x1xi1>
    %24 = arith.ori %20, %23 : vector<8x16x1xi1>
    %25 = vector.extract_strided_slice %13 {offsets = [0, 48, 0], sizes = [8, 16, 32], strides = [1, 1, 1]} : vector<8x64x32xf32> to vector<8x16x32xf32>
    %26 = arith.maximumf %22, %25 : vector<8x16x32xf32>
    %27 = vector.extract_strided_slice %3 {offsets = [0, 48, 0], sizes = [8, 16, 1], strides = [1, 1, 1]} : vector<8x64x1xi1> to vector<8x16x1xi1>
    %28 = arith.ori %24, %27 : vector<8x16x1xi1>
    %cst_6 = arith.constant 0.000000e+00 : f32
    %29 = vector.shape_cast %28 : vector<8x16x1xi1> to vector<8x16x1xi1>
    %30 = vector.broadcast %29 : vector<8x16x1xi1> to vector<8x16x32xi1>
    %31 = vector.broadcast %cst_6 : f32 to vector<8x16x32xf32>
    %32 = arith.select %30, %26, %31 : vector<8x16x32xi1>, vector<8x16x32xf32>
    %c0_7 = arith.constant 0 : index
    %c0_8 = arith.constant 0 : index
    %c0_9 = arith.constant 0 : index
    %33 = vector.load %arg3[%c0_7, %c0_8, %c0_9] : memref<8x16x32xf32, #tpu.memory_space<vmem>>, vector<8x16x32xf32>
    tpu.vector_store %arg3[%c0_7, %c0_8, %c0_9], %32 {strides = array<i32>} : memref<8x16x32xf32, #tpu.memory_space<vmem>>, vector<8x16x32xf32>,
    return
  }
  func.func @transform_0(%arg0: i32) -> (i32, i32, i32) {
    %c0_i32 = arith.constant 0 : i32
    %c0_i32_0 = arith.constant 0 : i32
    %c0_i32_1 = arith.constant 0 : i32
    return %arg0, %c0_i32, %c0_i32_0 : i32, i32, i32
  }
  func.func @transform_1(%arg0: i32) -> (i32, i32, i32) {
    %c0_i32 = arith.constant 0 : i32
    %c0_i32_0 = arith.constant 0 : i32
    %c0_i32_1 = arith.constant 0 : i32
    return %arg0, %c0_i32, %c0_i32_0 : i32, i32, i32
  }
  func.func @transform_2(%arg0: i32) -> (i32, i32, i32) {
    %c0_i32 = arith.constant 0 : i32
    %c0_i32_0 = arith.constant 0 : i32
    %c0_i32_1 = arith.constant 0 : i32
    return %arg0, %c0_i32, %c0_i32_0 : i32, i32, i32
  }
}

</mosaic_0001>

<llo_original>
// kernel: tpu_custom_call.1
$region0: #{tpu_custom_call.1}
  #allocation0 [shape = 'u32[]', space=smem, size = 0x4, offset = 0x4, fixed_abs, tag = 'smem constant byte address 0x4 - core index']
  #allocation1 [shape = 'u32[144,128]{1,0:T(1,128)}', space=vmem, size = 0x12000, scoped, tag = 'internal scratch']
  %s0 = inlined_call_operand.vmem [shape: f32[8,16,32], index: 0, kind: input, shape index: {}]
  %s1 = inlined_call_operand.vmem [shape: s32[8,64,1], index: 1, kind: input, shape index: {}]
  %s2 = inlined_call_operand.hbm [shape: f32[8,16,32], index: 2, kind: output, shape index: {}]
  %s3 = sld [smem:[#allocation0]]
  $region18: #{tpu_custom_call.1} parent=0
    _
  %s5 = ssub.s32 1, %s3
  %s6 = scalar_select 0, %s5, %s3
  $region1: #{tpu_custom_call.1} parent=0
    #allocation2 [shape = 'u8[65536]{0}', space=vmem, size = 0x10000, scoped, tag = 'output window, operand 0, single buffered']
    #allocation3 [shape = 's32[1]{0}', space=sflag, size = 0x4, scoped, tag = 'scoped memory for tpu_custom_call.1']
    %7 = vsyncpa [#allocation3], 0
    // Predicated region
    $region2: #{tpu_custom_call.1} parent=1 // pred_check
      _
    $region3: #{tpu_custom_call.1} parent=1 // pred_check_branch
      %9 = sbr.rel (0) target = $region5
    $region4: #{tpu_custom_call.1} parent=1 // pred_region
      _
    $region5: #{tpu_custom_call.1} parent=1 // pred_fallthru
      _
    // Predicated region
    $region6: #{tpu_custom_call.1} parent=1 // pred_check
      _
    $region7: #{tpu_custom_call.1} parent=1 // pred_check_branch
      %11 = sbr.rel (0) target = $region9
    $region8: #{tpu_custom_call.1} parent=1 // pred_region
      _
    $region9: #{tpu_custom_call.1} parent=1 // pred_fallthru
      _
    %v12 = vld [vmem:[%s0] sm:$0xff]
    %v13 = vld [vmem:[%s0 + $0x8] sm:$0xff]
    %v14 = vld [vmem:[%s0 + $0x10] sm:$0xff]
    %v15 = vld [vmem:[%s0 + $0x18] sm:$0xff]
    %v16 = vld [vmem:[%s0 + $0x20] sm:$0xff]
    %v17 = vld [vmem:[%s0 + $0x28] sm:$0xff]
    %v18 = vld [vmem:[%s0 + $0x30] sm:$0xff]
    %v19 = vld [vmem:[%s0 + $0x38] sm:$0xff]
    %v20 = vld [vmem:[%s0 + $0x40] sm:$0xff]
    %v21 = vld [vmem:[%s0 + $0x48] sm:$0xff]
    %v22 = vld [vmem:[%s0 + $0x50] sm:$0xff]
    %v23 = vld [vmem:[%s0 + $0x58] sm:$0xff]
    %v24 = vld [vmem:[%s0 + $0x60] sm:$0xff]
    %v25 = vld [vmem:[%s0 + $0x68] sm:$0xff]
    %v26 = vld [vmem:[%s0 + $0x70] sm:$0xff]
    %v27 = vld [vmem:[%s0 + $0x78] sm:$0xff]
    %v28 = vld [vmem:[%s1] sm:$0xff]
    %v29 = vld [vmem:[%s1 + $0x8] sm:$0xff]
    %v30 = vld [vmem:[%s1 + $0x10] sm:$0xff]
    %v31 = vld [vmem:[%s1 + $0x18] sm:$0xff]
    %v32 = vld [vmem:[%s1 + $0x20] sm:$0xff]
    %v33 = vld [vmem:[%s1 + $0x28] sm:$0xff]
    %v34 = vld [vmem:[%s1 + $0x30] sm:$0xff]
    %v35 = vld [vmem:[%s1 + $0x38] sm:$0xff]
    %v36 = vld [vmem:[%s1 + $0x40] sm:$0xff]
    %v37 = vld [vmem:[%s1 + $0x48] sm:$0xff]
    %v38 = vld [vmem:[%s1 + $0x50] sm:$0xff]
    %v39 = vld [vmem:[%s1 + $0x58] sm:$0xff]
    %v40 = vld [vmem:[%s1 + $0x60] sm:$0xff]
    %v41 = vld [vmem:[%s1 + $0x68] sm:$0xff]
    %v42 = vld [vmem:[%s1 + $0x70] sm:$0xff]
    %v43 = vld [vmem:[%s1 + $0x78] sm:$0xff]
    %v44 = vld [vmem:[%s1 + $0x80] sm:$0xff]
    %v45 = vld [vmem:[%s1 + $0x88] sm:$0xff]
    %v46 = vld [vmem:[%s1 + $0x90] sm:$0xff]
    %v47 = vld [vmem:[%s1 + $0x98] sm:$0xff]
    %v48 = vld [vmem:[%s1 + $0xa0] sm:$0xff]
    %v49 = vld [vmem:[%s1 + $0xa8] sm:$0xff]
    %v50 = vld [vmem:[%s1 + $0xb0] sm:$0xff]
    %v51 = vld [vmem:[%s1 + $0xb8] sm:$0xff]
    %v52 = vld [vmem:[%s1 + $0xc0] sm:$0xff]
    %v53 = vld [vmem:[%s1 + $0xc8] sm:$0xff]
    %v54 = vld [vmem:[%s1 + $0xd0] sm:$0xff]
    %v55 = vld [vmem:[%s1 + $0xd8] sm:$0xff]
    %v56 = vld [vmem:[%s1 + $0xe0] sm:$0xff]
    %v57 = vld [vmem:[%s1 + $0xe8] sm:$0xff]
    %v58 = vld [vmem:[%s1 + $0xf0] sm:$0xff]
    %v59 = vld [vmem:[%s1 + $0xf8] sm:$0xff]
    %v60 = vld [vmem:[%s1 + $0x100] sm:$0xff]
    %v61 = vld [vmem:[%s1 + $0x108] sm:$0xff]
    %v62 = vld [vmem:[%s1 + $0x110] sm:$0xff]
    %v63 = vld [vmem:[%s1 + $0x118] sm:$0xff]
    %v64 = vld [vmem:[%s1 + $0x120] sm:$0xff]
    %v65 = vld [vmem:[%s1 + $0x128] sm:$0xff]
    %v66 = vld [vmem:[%s1 + $0x130] sm:$0xff]
    %v67 = vld [vmem:[%s1 + $0x138] sm:$0xff]
    %v68 = vld [vmem:[%s1 + $0x140] sm:$0xff]
    %v69 = vld [vmem:[%s1 + $0x148] sm:$0xff]
    %v70 = vld [vmem:[%s1 + $0x150] sm:$0xff]
    %v71 = vld [vmem:[%s1 + $0x158] sm:$0xff]
    %v72 = vld [vmem:[%s1 + $0x160] sm:$0xff]
    %v73 = vld [vmem:[%s1 + $0x168] sm:$0xff]
    %v74 = vld [vmem:[%s1 + $0x170] sm:$0xff]
    %v75 = vld [vmem:[%s1 + $0x178] sm:$0xff]
    %v76 = vld [vmem:[%s1 + $0x180] sm:$0xff]
    %v77 = vld [vmem:[%s1 + $0x188] sm:$0xff]
    %v78 = vld [vmem:[%s1 + $0x190] sm:$0xff]
    %v79 = vld [vmem:[%s1 + $0x198] sm:$0xff]
    %v80 = vld [vmem:[%s1 + $0x1a0] sm:$0xff]
    %v81 = vld [vmem:[%s1 + $0x1a8] sm:$0xff]
    %v82 = vld [vmem:[%s1 + $0x1b0] sm:$0xff]
    %v83 = vld [vmem:[%s1 + $0x1b8] sm:$0xff]
    %v84 = vld [vmem:[%s1 + $0x1c0] sm:$0xff]
    %v85 = vld [vmem:[%s1 + $0x1c8] sm:$0xff]
    %v86 = vld [vmem:[%s1 + $0x1d0] sm:$0xff]
    %v87 = vld [vmem:[%s1 + $0x1d8] sm:$0xff]
    %v88 = vld [vmem:[%s1 + $0x1e0] sm:$0xff]
    %v89 = vld [vmem:[%s1 + $0x1e8] sm:$0xff]
    %v90 = vld [vmem:[%s1 + $0x1f0] sm:$0xff]
    %v91 = vld [vmem:[%s1 + $0x1f8] sm:$0xff]
    %vm92 = vcmp.ne.s32.totalorder %v28, 4294967295
    %vm93 = vcmp.ne.s32.totalorder %v29, 4294967295
    %vm94 = vcmp.ne.s32.totalorder %v30, 4294967295
    %vm95 = vcmp.ne.s32.totalorder %v31, 4294967295
    %vm96 = vcmp.ne.s32.totalorder %v32, 4294967295
    %vm97 = vcmp.ne.s32.totalorder %v33, 4294967295
    %vm98 = vcmp.ne.s32.totalorder %v34, 4294967295
    %vm99 = vcmp.ne.s32.totalorder %v35, 4294967295
    %vm100 = vcmp.ne.s32.totalorder %v36, 4294967295
    %vm101 = vcmp.ne.s32.totalorder %v37, 4294967295
    %vm102 = vcmp.ne.s32.totalorder %v38, 4294967295
    %vm103 = vcmp.ne.s32.totalorder %v39, 4294967295
    %vm104 = vcmp.ne.s32.totalorder %v40, 4294967295
    %vm105 = vcmp.ne.s32.totalorder %v41, 4294967295
    %vm106 = vcmp.ne.s32.totalorder %v42, 4294967295
    %vm107 = vcmp.ne.s32.totalorder %v43, 4294967295
    %vm108 = vcmp.ne.s32.totalorder %v44, 4294967295
    %vm109 = vcmp.ne.s32.totalorder %v45, 4294967295
    %vm110 = vcmp.ne.s32.totalorder %v46, 4294967295
    %vm111 = vcmp.ne.s32.totalorder %v47, 4294967295
    %vm112 = vcmp.ne.s32.totalorder %v48, 4294967295
    %vm113 = vcmp.ne.s32.totalorder %v49, 4294967295
    %vm114 = vcmp.ne.s32.totalorder %v50, 4294967295
    %vm115 = vcmp.ne.s32.totalorder %v51, 4294967295
    %vm116 = vcmp.ne.s32.totalorder %v52, 4294967295
    %vm117 = vcmp.ne.s32.totalorder %v53, 4294967295
    %vm118 = vcmp.ne.s32.totalorder %v54, 4294967295
    %vm119 = vcmp.ne.s32.totalorder %v55, 4294967295
    %vm120 = vcmp.ne.s32.totalorder %v56, 4294967295
    %vm121 = vcmp.ne.s32.totalorder %v57, 4294967295
    %vm122 = vcmp.ne.s32.totalorder %v58, 4294967295
    %vm123 = vcmp.ne.s32.totalorder %v59, 4294967295
    %vm124 = vcmp.ne.s32.totalorder %v60, 4294967295
    %vm125 = vcmp.ne.s32.totalorder %v61, 4294967295
    %vm126 = vcmp.ne.s32.totalorder %v62, 4294967295
    %vm127 = vcmp.ne.s32.totalorder %v63, 4294967295
    %vm128 = vcmp.ne.s32.totalorder %v64, 4294967295
    %vm129 = vcmp.ne.s32.totalorder %v65, 4294967295
    %vm130 = vcmp.ne.s32.totalorder %v66, 4294967295
    %vm131 = vcmp.ne.s32.totalorder %v67, 4294967295
    %vm132 = vcmp.ne.s32.totalorder %v68, 4294967295
    %vm133 = vcmp.ne.s32.totalorder %v69, 4294967295
    %vm134 = vcmp.ne.s32.totalorder %v70, 4294967295
    %vm135 = vcmp.ne.s32.totalorder %v71, 4294967295
    %vm136 = vcmp.ne.s32.totalorder %v72, 4294967295
    %vm137 = vcmp.ne.s32.totalorder %v73, 4294967295
    %vm138 = vcmp.ne.s32.totalorder %v74, 4294967295
    %vm139 = vcmp.ne.s32.totalorder %v75, 4294967295
    %vm140 = vcmp.ne.s32.totalorder %v76, 4294967295
    %vm141 = vcmp.ne.s32.totalorder %v77, 4294967295
    %vm142 = vcmp.ne.s32.totalorder %v78, 4294967295
    %vm143 = vcmp.ne.s32.totalorder %v79, 4294967295
    %vm144 = vcmp.ne.s32.totalorder %v80, 4294967295
    %vm145 = vcmp.ne.s32.totalorder %v81, 4294967295
    %vm146 = vcmp.ne.s32.totalorder %v82, 4294967295
    %vm147 = vcmp.ne.s32.totalorder %v83, 4294967295
    %vm148 = vcmp.ne.s32.totalorder %v84, 4294967295
    %vm149 = vcmp.ne.s32.totalorder %v85, 4294967295
    %vm150 = vcmp.ne.s32.totalorder %v86, 4294967295
    %vm151 = vcmp.ne.s32.totalorder %v87, 4294967295
    %vm152 = vcmp.ne.s32.totalorder %v88, 4294967295
    %vm153 = vcmp.ne.s32.totalorder %v89, 4294967295
    %vm154 = vcmp.ne.s32.totalorder %v90, 4294967295
    %vm155 = vcmp.ne.s32.totalorder %v91, 4294967295
    %v156 = vlaneseq
    %v157 = vand.u32 %v156, 127
    %158 = vset.pattern.permute.xlu0 0
    %159 = vperm.xlu0 %158, %v28
    %v160 = vpop.permute.xlu0 %159
    %161 = vset.pattern.permute.xlu0 0
    %162 = vperm.xlu0 %161, %v29
    %v163 = vpop.permute.xlu0 %162
    %164 = vset.pattern.permute.xlu0 0
    %165 = vperm.xlu0 %164, %v30
    %v166 = vpop.permute.xlu0 %165
    %167 = vset.pattern.permute.xlu0 0
    %168 = vperm.xlu0 %167, %v31
    %v169 = vpop.permute.xlu0 %168
    %170 = vset.pattern.permute.xlu0 0
    %171 = vperm.xlu0 %170, %v32
    %v172 = vpop.permute.xlu0 %171
    %173 = vset.pattern.permute.xlu0 0
    %174 = vperm.xlu0 %173, %v33
    %v175 = vpop.permute.xlu0 %174
    %176 = vset.pattern.permute.xlu0 0
    %177 = vperm.xlu0 %176, %v34
    %v178 = vpop.permute.xlu0 %177
    %179 = vset.pattern.permute.xlu0 0
    %180 = vperm.xlu0 %179, %v35
    %v181 = vpop.permute.xlu0 %180
    %182 = vset.pattern.permute.xlu0 0
    %183 = vperm.xlu0 %182, %v36
    %v184 = vpop.permute.xlu0 %183
    %185 = vset.pattern.permute.xlu0 0
    %186 = vperm.xlu0 %185, %v37
    %v187 = vpop.permute.xlu0 %186
    %188 = vset.pattern.permute.xlu0 0
    %189 = vperm.xlu0 %188, %v38
    %v190 = vpop.permute.xlu0 %189
    %191 = vset.pattern.permute.xlu0 0
    %192 = vperm.xlu0 %191, %v39
    %v193 = vpop.permute.xlu0 %192
    %194 = vset.pattern.permute.xlu0 0
    %195 = vperm.xlu0 %194, %v40
    %v196 = vpop.permute.xlu0 %195
    %197 = vset.pattern.permute.xlu0 0
    %198 = vperm.xlu0 %197, %v41
    %v199 = vpop.permute.xlu0 %198
    %200 = vset.pattern.permute.xlu0 0
    %201 = vperm.xlu0 %200, %v42
    %v202 = vpop.permute.xlu0 %201
    %203 = vset.pattern.permute.xlu0 0
    %204 = vperm.xlu0 %203, %v43
    %v205 = vpop.permute.xlu0 %204
    %206 = vset.pattern.permute.xlu0 0
    %207 = vperm.xlu0 %206, %v44
    %v208 = vpop.permute.xlu0 %207
    %209 = vset.pattern.permute.xlu0 0
    %210 = vperm.xlu0 %209, %v45
    %v211 = vpop.permute.xlu0 %210
    %212 = vset.pattern.permute.xlu0 0
    %213 = vperm.xlu0 %212, %v46
    %v214 = vpop.permute.xlu0 %213
    %215 = vset.pattern.permute.xlu0 0
    %216 = vperm.xlu0 %215, %v47
    %v217 = vpop.permute.xlu0 %216
    %218 = vset.pattern.permute.xlu0 0
    %219 = vperm.xlu0 %218, %v48
    %v220 = vpop.permute.xlu0 %219
    %221 = vset.pattern.permute.xlu0 0
    %222 = vperm.xlu0 %221, %v49
    %v223 = vpop.permute.xlu0 %222
    %224 = vset.pattern.permute.xlu0 0
    %225 = vperm.xlu0 %224, %v50
    %v226 = vpop.permute.xlu0 %225
    %227 = vset.pattern.permute.xlu0 0
    %228 = vperm.xlu0 %227, %v51
    %v229 = vpop.permute.xlu0 %228
    %230 = vset.pattern.permute.xlu0 0
    %231 = vperm.xlu0 %230, %v52
    %v232 = vpop.permute.xlu0 %231
    %233 = vset.pattern.permute.xlu0 0
    %234 = vperm.xlu0 %233, %v53
    %v235 = vpop.permute.xlu0 %234
    %236 = vset.pattern.permute.xlu0 0
    %237 = vperm.xlu0 %236, %v54
    %v238 = vpop.permute.xlu0 %237
    %239 = vset.pattern.permute.xlu0 0
    %240 = vperm.xlu0 %239, %v55
    %v241 = vpop.permute.xlu0 %240
    %242 = vset.pattern.permute.xlu0 0
    %243 = vperm.xlu0 %242, %v56
    %v244 = vpop.permute.xlu0 %243
    %245 = vset.pattern.permute.xlu0 0
    %246 = vperm.xlu0 %245, %v57
    %v247 = vpop.permute.xlu0 %246
    %248 = vset.pattern.permute.xlu0 0
    %249 = vperm.xlu0 %248, %v58
    %v250 = vpop.permute.xlu0 %249
    %251 = vset.pattern.permute.xlu0 0
    %252 = vperm.xlu0 %251, %v59
    %v253 = vpop.permute.xlu0 %252
    %254 = vset.pattern.permute.xlu0 0
    %255 = vperm.xlu0 %254, %v60
    %v256 = vpop.permute.xlu0 %255
    %257 = vset.pattern.permute.xlu0 0
    %258 = vperm.xlu0 %257, %v61
    %v259 = vpop.permute.xlu0 %258
    %260 = vset.pattern.permute.xlu0 0
    %261 = vperm.xlu0 %260, %v62
    %v262 = vpop.permute.xlu0 %261
    %263 = vset.pattern.permute.xlu0 0
    %264 = vperm.xlu0 %263, %v63
    %v265 = vpop.permute.xlu0 %264
    %266 = vset.pattern.permute.xlu0 0
    %267 = vperm.xlu0 %266, %v64
    %v268 = vpop.permute.xlu0 %267
    %269 = vset.pattern.permute.xlu0 0
    %270 = vperm.xlu0 %269, %v65
    %v271 = vpop.permute.xlu0 %270
    %272 = vset.pattern.permute.xlu0 0
    %273 = vperm.xlu0 %272, %v66
    %v274 = vpop.permute.xlu0 %273
    %275 = vset.pattern.permute.xlu0 0
    %276 = vperm.xlu0 %275, %v67
    %v277 = vpop.permute.xlu0 %276
    %278 = vset.pattern.permute.xlu0 0
    %279 = vperm.xlu0 %278, %v68
    %v280 = vpop.permute.xlu0 %279
    %281 = vset.pattern.permute.xlu0 0
    %282 = vperm.xlu0 %281, %v69
    %v283 = vpop.permute.xlu0 %282
    %284 = vset.pattern.permute.xlu0 0
    %285 = vperm.xlu0 %284, %v70
    %v286 = vpop.permute.xlu0 %285
    %287 = vset.pattern.permute.xlu0 0
    %288 = vperm.xlu0 %287, %v71
    %v289 = vpop.permute.xlu0 %288
    %290 = vset.pattern.permute.xlu0 0
    %291 = vperm.xlu0 %290, %v72
    %v292 = vpop.permute.xlu0 %291
    %293 = vset.pattern.permute.xlu0 0
    %294 = vperm.xlu0 %293, %v73
    %v295 = vpop.permute.xlu0 %294
    %296 = vset.pattern.permute.xlu0 0
    %297 = vperm.xlu0 %296, %v74
    %v298 = vpop.permute.xlu0 %297
    %299 = vset.pattern.permute.xlu0 0
    %300 = vperm.xlu0 %299, %v75
    %v301 = vpop.permute.xlu0 %300
    %302 = vset.pattern.permute.xlu0 0
    %303 = vperm.xlu0 %302, %v76
    %v304 = vpop.permute.xlu0 %303
    %305 = vset.pattern.permute.xlu0 0
    %306 = vperm.xlu0 %305, %v77
    %v307 = vpop.permute.xlu0 %306
    %308 = vset.pattern.permute.xlu0 0
    %309 = vperm.xlu0 %308, %v78
    %v310 = vpop.permute.xlu0 %309
    %311 = vset.pattern.permute.xlu0 0
    %312 = vperm.xlu0 %311, %v79
    %v313 = vpop.permute.xlu0 %312
    %314 = vset.pattern.permute.xlu0 0
    %315 = vperm.xlu0 %314, %v80
    %v316 = vpop.permute.xlu0 %315
    %317 = vset.pattern.permute.xlu0 0
    %318 = vperm.xlu0 %317, %v81
    %v319 = vpop.permute.xlu0 %318
    %320 = vset.pattern.permute.xlu0 0
    %321 = vperm.xlu0 %320, %v82
    %v322 = vpop.permute.xlu0 %321
    %323 = vset.pattern.permute.xlu0 0
    %324 = vperm.xlu0 %323, %v83
    %v325 = vpop.permute.xlu0 %324
    %326 = vset.pattern.permute.xlu0 0
    %327 = vperm.xlu0 %326, %v84
    %v328 = vpop.permute.xlu0 %327
    %329 = vset.pattern.permute.xlu0 0
    %330 = vperm.xlu0 %329, %v85
    %v331 = vpop.permute.xlu0 %330
    %332 = vset.pattern.permute.xlu0 0
    %333 = vperm.xlu0 %332, %v86
    %v334 = vpop.permute.xlu0 %333
    %335 = vset.pattern.permute.xlu0 0
    %336 = vperm.xlu0 %335, %v87
    %v337 = vpop.permute.xlu0 %336
    %338 = vset.pattern.permute.xlu0 0
    %339 = vperm.xlu0 %338, %v88
    %v340 = vpop.permute.xlu0 %339
    %341 = vset.pattern.permute.xlu0 0
    %342 = vperm.xlu0 %341, %v89
    %v343 = vpop.permute.xlu0 %342
    %344 = vset.pattern.permute.xlu0 0
    %345 = vperm.xlu0 %344, %v90
    %v346 = vpop.permute.xlu0 %345
    %347 = vset.pattern.permute.xlu0 0
    %348 = vperm.xlu0 %347, %v91
    %v349 = vpop.permute.xlu0 %348
    %vm350 = vcmp.eq.s32.totalorder %v157, %v160
    %vm351 = vcmp.eq.s32.totalorder %v157, %v163
    %vm352 = vcmp.eq.s32.totalorder %v157, %v166
    %vm353 = vcmp.eq.s32.totalorder %v157, %v169
    %vm354 = vcmp.eq.s32.totalorder %v157, %v172
    %vm355 = vcmp.eq.s32.totalorder %v157, %v175
    %vm356 = vcmp.eq.s32.totalorder %v157, %v178
    %vm357 = vcmp.eq.s32.totalorder %v157, %v181
    %vm358 = vcmp.eq.s32.totalorder %v157, %v184
    %vm359 = vcmp.eq.s32.totalorder %v157, %v187
    %vm360 = vcmp.eq.s32.totalorder %v157, %v190
    %vm361 = vcmp.eq.s32.totalorder %v157, %v193
    %vm362 = vcmp.eq.s32.totalorder %v157, %v196
    %vm363 = vcmp.eq.s32.totalorder %v157, %v199
    %vm364 = vcmp.eq.s32.totalorder %v157, %v202
    %vm365 = vcmp.eq.s32.totalorder %v157, %v205
    %vm366 = vcmp.eq.s32.totalorder %v157, %v208
    %vm367 = vcmp.eq.s32.totalorder %v157, %v211
    %vm368 = vcmp.eq.s32.totalorder %v157, %v214
    %vm369 = vcmp.eq.s32.totalorder %v157, %v217
    %vm370 = vcmp.eq.s32.totalorder %v157, %v220
    %vm371 = vcmp.eq.s32.totalorder %v157, %v223
    %vm372 = vcmp.eq.s32.totalorder %v157, %v226
    %vm373 = vcmp.eq.s32.totalorder %v157, %v229
    %vm374 = vcmp.eq.s32.totalorder %v157, %v232
    %vm375 = vcmp.eq.s32.totalorder %v157, %v235
    %vm376 = vcmp.eq.s32.totalorder %v157, %v238
    %vm377 = vcmp.eq.s32.totalorder %v157, %v241
    %vm378 = vcmp.eq.s32.totalorder %v157, %v244
    %vm379 = vcmp.eq.s32.totalorder %v157, %v247
    %vm380 = vcmp.eq.s32.totalorder %v157, %v250
    %vm381 = vcmp.eq.s32.totalorder %v157, %v253
    %vm382 = vcmp.eq.s32.totalorder %v157, %v256
    %vm383 = vcmp.eq.s32.totalorder %v157, %v259
    %vm384 = vcmp.eq.s32.totalorder %v157, %v262
    %vm385 = vcmp.eq.s32.totalorder %v157, %v265
    %vm386 = vcmp.eq.s32.totalorder %v157, %v268
    %vm387 = vcmp.eq.s32.totalorder %v157, %v271
    %vm388 = vcmp.eq.s32.totalorder %v157, %v274
    %vm389 = vcmp.eq.s32.totalorder %v157, %v277
    %vm390 = vcmp.eq.s32.totalorder %v157, %v280
    %vm391 = vcmp.eq.s32.totalorder %v157, %v283
    %vm392 = vcmp.eq.s32.totalorder %v157, %v286
    %vm393 = vcmp.eq.s32.totalorder %v157, %v289
    %vm394 = vcmp.eq.s32.totalorder %v157, %v292
    %vm395 = vcmp.eq.s32.totalorder %v157, %v295
    %vm396 = vcmp.eq.s32.totalorder %v157, %v298
    %vm397 = vcmp.eq.s32.totalorder %v157, %v301
    %vm398 = vcmp.eq.s32.totalorder %v157, %v304
    %vm399 = vcmp.eq.s32.totalorder %v157, %v307
    %vm400 = vcmp.eq.s32.totalorder %v157, %v310
    %vm401 = vcmp.eq.s32.totalorder %v157, %v313
    %vm402 = vcmp.eq.s32.totalorder %v157, %v316
    %vm403 = vcmp.eq.s32.totalorder %v157, %v319
    %vm404 = vcmp.eq.s32.totalorder %v157, %v322
    %vm405 = vcmp.eq.s32.totalorder %v157, %v325
    %vm406 = vcmp.eq.s32.totalorder %v157, %v328
    %vm407 = vcmp.eq.s32.totalorder %v157, %v331
    %vm408 = vcmp.eq.s32.totalorder %v157, %v334
    %vm409 = vcmp.eq.s32.totalorder %v157, %v337
    %vm410 = vcmp.eq.s32.totalorder %v157, %v340
    %vm411 = vcmp.eq.s32.totalorder %v157, %v343
    %vm412 = vcmp.eq.s32.totalorder %v157, %v346
    %vm413 = vcmp.eq.s32.totalorder %v157, %v349
    %v414 = vsel %vm350, 1, 0
    %v415 = vsel %vm351, 1, 0
    %v416 = vsel %vm352, 1, 0
    %v417 = vsel %vm353, 1, 0
    %v418 = vsel %vm354, 1, 0
    %v419 = vsel %vm355, 1, 0
    %v420 = vsel %vm356, 1, 0
    %v421 = vsel %vm357, 1, 0
    %v422 = vsel %vm358, 1, 0
    %v423 = vsel %vm359, 1, 0
    %v424 = vsel %vm360, 1, 0
    %v425 = vsel %vm361, 1, 0
    %v426 = vsel %vm362, 1, 0
    %v427 = vsel %vm363, 1, 0
    %v428 = vsel %vm364, 1, 0
    %v429 = vsel %vm365, 1, 0
    %v430 = vsel %vm366, 1, 0
    %v431 = vsel %vm367, 1, 0
    %v432 = vsel %vm368, 1, 0
    %v433 = vsel %vm369, 1, 0
    %v434 = vsel %vm370, 1, 0
    %v435 = vsel %vm371, 1, 0
    %v436 = vsel %vm372, 1, 0
    %v437 = vsel %vm373, 1, 0
    %v438 = vsel %vm374, 1, 0
    %v439 = vsel %vm375, 1, 0
    %v440 = vsel %vm376, 1, 0
    %v441 = vsel %vm377, 1, 0
    %v442 = vsel %vm378, 1, 0
    %v443 = vsel %vm379, 1, 0
    %v444 = vsel %vm380, 1, 0
    %v445 = vsel %vm381, 1, 0
    %v446 = vsel %vm382, 1, 0
    %v447 = vsel %vm383, 1, 0
    %v448 = vsel %vm384, 1, 0
    %v449 = vsel %vm385, 1, 0
    %v450 = vsel %vm386, 1, 0
    %v451 = vsel %vm387, 1, 0
    %v452 = vsel %vm388, 1, 0
    %v453 = vsel %vm389, 1, 0
    %v454 = vsel %vm390, 1, 0
    %v455 = vsel %vm391, 1, 0
    %v456 = vsel %vm392, 1, 0
    %v457 = vsel %vm393, 1, 0
    %v458 = vsel %vm394, 1, 0
    %v459 = vsel %vm395, 1, 0
    %v460 = vsel %vm396, 1, 0
    %v461 = vsel %vm397, 1, 0
    %v462 = vsel %vm398, 1, 0
    %v463 = vsel %vm399, 1, 0
    %v464 = vsel %vm400, 1, 0
    %v465 = vsel %vm401, 1, 0
    %v466 = vsel %vm402, 1, 0
    %v467 = vsel %vm403, 1, 0
    %v468 = vsel %vm404, 1, 0
    %v469 = vsel %vm405, 1, 0
    %v470 = vsel %vm406, 1, 0
    %v471 = vsel %vm407, 1, 0
    %v472 = vsel %vm408, 1, 0
    %v473 = vsel %vm409, 1, 0
    %v474 = vsel %vm410, 1, 0
    %v475 = vsel %vm411, 1, 0
    %v476 = vsel %vm412, 1, 0
    %v477 = vsel %vm413, 1, 0
    %v478 = vcvt.s32.f32 %v414
    %v479 = vcvt.s32.f32 %v415
    %v480 = vcvt.s32.f32 %v416
    %v481 = vcvt.s32.f32 %v417
    %v482 = vcvt.s32.f32 %v418
    %v483 = vcvt.s32.f32 %v419
    %v484 = vcvt.s32.f32 %v420
    %v485 = vcvt.s32.f32 %v421
    %v486 = vcvt.s32.f32 %v422
    %v487 = vcvt.s32.f32 %v423
    %v488 = vcvt.s32.f32 %v424
    %v489 = vcvt.s32.f32 %v425
    %v490 = vcvt.s32.f32 %v426
    %v491 = vcvt.s32.f32 %v427
    %v492 = vcvt.s32.f32 %v428
    %v493 = vcvt.s32.f32 %v429
    %v494 = vcvt.s32.f32 %v430
    %v495 = vcvt.s32.f32 %v431
    %v496 = vcvt.s32.f32 %v432
    %v497 = vcvt.s32.f32 %v433
    %v498 = vcvt.s32.f32 %v434
    %v499 = vcvt.s32.f32 %v435
    %v500 = vcvt.s32.f32 %v436
    %v501 = vcvt.s32.f32 %v437
    %v502 = vcvt.s32.f32 %v438
    %v503 = vcvt.s32.f32 %v439
    %v504 = vcvt.s32.f32 %v440
    %v505 = vcvt.s32.f32 %v441
    %v506 = vcvt.s32.f32 %v442
    %v507 = vcvt.s32.f32 %v443
    %v508 = vcvt.s32.f32 %v444
    %v509 = vcvt.s32.f32 %v445
    %v510 = vcvt.s32.f32 %v446
    %v511 = vcvt.s32.f32 %v447
    %v512 = vcvt.s32.f32 %v448
    %v513 = vcvt.s32.f32 %v449
    %v514 = vcvt.s32.f32 %v450
    %v515 = vcvt.s32.f32 %v451
    %v516 = vcvt.s32.f32 %v452
    %v517 = vcvt.s32.f32 %v453
    %v518 = vcvt.s32.f32 %v454
    %v519 = vcvt.s32.f32 %v455
    %v520 = vcvt.s32.f32 %v456
    %v521 = vcvt.s32.f32 %v457
    %v522 = vcvt.s32.f32 %v458
    %v523 = vcvt.s32.f32 %v459
    %v524 = vcvt.s32.f32 %v460
    %v525 = vcvt.s32.f32 %v461
    %v526 = vcvt.s32.f32 %v462
    %v527 = vcvt.s32.f32 %v463
    %v528 = vcvt.s32.f32 %v464
    %v529 = vcvt.s32.f32 %v465
    %v530 = vcvt.s32.f32 %v466
    %v531 = vcvt.s32.f32 %v467
    %v532 = vcvt.s32.f32 %v468
    %v533 = vcvt.s32.f32 %v469
    %v534 = vcvt.s32.f32 %v470
    %v535 = vcvt.s32.f32 %v471
    %v536 = vcvt.s32.f32 %v472
    %v537 = vcvt.s32.f32 %v473
    %v538 = vcvt.s32.f32 %v474
    %v539 = vcvt.s32.f32 %v475
    %v540 = vcvt.s32.f32 %v476
    %v541 = vcvt.s32.f32 %v477
    %vm542 = vcmask 130048
    %v544 = vsel %vm542, %v478, 0
    %v547 = vsel %vm542, %v479, 0
    %v550 = vsel %vm542, %v480, 0
    %v553 = vsel %vm542, %v481, 0
    %v556 = vsel %vm542, %v482, 0
    %v559 = vsel %vm542, %v483, 0
    %v562 = vsel %vm542, %v484, 0
    %v565 = vsel %vm542, %v485, 0
    %567 = vmatprep.subr.mxu0 0.0
    %568 = vmatpush1.msra.mxu0 %v12
    %569 = vmatprep.subr.mxu0 0.0
    %570 = vmatpush1.msra.mxu0 %v13
    %571 = vmatprep.subr.mxu0 0.0
    %572 = vmatpush1.msra.mxu0 0.0
    %573 = vmatprep.subr.mxu0 0.0
    %574 = vmatpush1.msra.mxu0 0.0
    %575 = vmatprep.subr.mxu0 0.0
    %576 = vmatpush1.msra.mxu0 0.0
    %577 = vmatprep.subr.mxu0 0.0
    %578 = vmatpush1.msra.mxu0 0.0
    %579 = vmatprep.subr.mxu0 0.0
    %580 = vmatpush1.msra.mxu0 0.0
    %581 = vmatprep.subr.mxu0 0.0
    %582 = vmatpush1.msra.mxu0 0.0
    %583 = vmatprep.subr.mxu0 0.0
    %584 = vmatpush1.msra.mxu0 0.0
    %585 = vmatprep.subr.mxu0 0.0
    %586 = vmatpush1.msra.mxu0 0.0
    %587 = vmatprep.subr.mxu0 0.0
    %588 = vmatpush1.msra.mxu0 0.0
    %589 = vmatprep.subr.mxu0 0.0
    %590 = vmatpush1.msra.mxu0 0.0
    %591 = vmatprep.subr.mxu0 0.0
    %592 = vmatpush1.msra.mxu0 0.0
    %593 = vmatprep.subr.mxu0 0.0
    %594 = vmatpush1.msra.mxu0 0.0
    %595 = vmatprep.subr.mxu0 0.0
    %596 = vmatpush1.msra.mxu0 0.0
    %597 = vmatprep.subr.mxu0 0.0
    %598 = vmatpush1.msra.mxu0 0.0
    %599 = vmatprep.subr.mxu0 0.0
    %600 = vmatpush1.msra.mxu0 0.0
    %601 = vmatprep.subr.mxu0 0.0
    %602 = vmatpush1.msra.mxu0 0.0
    %603 = vmatprep.subr.mxu0 0.0
    %604 = vmatpush1.msra.mxu0 0.0
    %605 = vmatprep.subr.mxu0 0.0
    %606 = vmatpush1.msra.mxu0 0.0
    %607 = vmatprep.subr.mxu0 0.0
    %608 = vmatpush1.msra.mxu0 0.0
    %609 = vmatprep.subr.mxu0 0.0
    %610 = vmatpush1.msra.mxu0 0.0
    %611 = vmatprep.subr.mxu0 0.0
    %612 = vmatpush1.msra.mxu0 0.0
    %613 = vmatprep.subr.mxu0 0.0
    %614 = vmatpush1.msra.mxu0 0.0
    %615 = vmatprep.subr.mxu0 0.0
    %616 = vmatpush1.msra.mxu0 0.0
    %617 = vmatprep.subr.mxu0 0.0
    %618 = vmatpush1.msra.mxu0 0.0
    %619 = vmatprep.subr.mxu0 0.0
    %620 = vmatpush1.msra.mxu0 0.0
    %621 = vmatprep.subr.mxu0 0.0
    %622 = vmatpush1.msra.mxu0 0.0
    %623 = vmatprep.subr.mxu0 0.0
    %624 = vmatpush1.msra.mxu0 0.0
    %625 = vmatprep.subr.mxu0 0.0
    %626 = vmatpush1.msra.mxu0 0.0
    %627 = vmatprep.subr.mxu0 0.0
    %628 = vmatpush1.msra.mxu0 0.0
    %629 = vmatprep.subr.mxu0 0.0
    %630 = vmatpush1.msra.mxu0 0.0
    %631 = vmatprep.mubr.f32.mxu0 0.0
    %632 = vmatmul.mubr.f32.gmra.mrb[0].mxu0 %v544
    %v633 = vpop.f32.mrb[0].mxu0
    %v634 = vadd.f32 0.0, %v633
    %v635 = vpop.f32.mrb[0].mxu0
    %636 = vmatprep.mubr.f32.mxu0 0.0
    %637 = vmatmul.mubr.f32.gmra.mrb[0].mxu0 %v547
    %v638 = vpop.f32.mrb[0].mxu0
    %v639 = vadd.f32 0.0, %v638
    %v640 = vpop.f32.mrb[0].mxu0
    %641 = vmatprep.mubr.f32.mxu0 0.0
    %642 = vmatmul.mubr.f32.gmra.mrb[0].mxu0 %v550
    %v643 = vpop.f32.mrb[0].mxu0
    %v644 = vadd.f32 0.0, %v643
    %v645 = vpop.f32.mrb[0].mxu0
    %646 = vmatprep.mubr.f32.mxu0 0.0
    %647 = vmatmul.mubr.f32.gmra.mrb[0].mxu0 %v553
    %v648 = vpop.f32.mrb[0].mxu0
    %v649 = vadd.f32 0.0, %v648
    %v650 = vpop.f32.mrb[0].mxu0
    %651 = vmatprep.mubr.f32.mxu0 0.0
    %652 = vmatmul.mubr.f32.gmra.mrb[0].mxu0 %v556
    %v653 = vpop.f32.mrb[0].mxu0
    %v654 = vadd.f32 0.0, %v653
    %v655 = vpop.f32.mrb[0].mxu0
    %656 = vmatprep.mubr.f32.mxu0 0.0
    %657 = vmatmul.mubr.f32.gmra.mrb[0].mxu0 %v559
    %v658 = vpop.f32.mrb[0].mxu0
    %v659 = vadd.f32 0.0, %v658
    %v660 = vpop.f32.mrb[0].mxu0
    %661 = vmatprep.mubr.f32.mxu0 0.0
    %662 = vmatmul.mubr.f32.gmra.mrb[0].mxu0 %v562
    %v663 = vpop.f32.mrb[0].mxu0
    %v664 = vadd.f32 0.0, %v663
    %v665 = vpop.f32.mrb[0].mxu0
    %666 = vmatprep.mubr.f32.mxu0 0.0
    %667 = vmatmul.mubr.f32.gmra.mrb[0].mxu0 %v565
    %v668 = vpop.f32.mrb[0].mxu0
    %v669 = vadd.f32 0.0, %v668
    %v670 = vpop.f32.mrb[0].mxu0
    %671 = vdwg.mxu0
    %v673 = vsel %vm542, %v486, 0
    %v676 = vsel %vm542, %v487, 0
    %v679 = vsel %vm542, %v488, 0
    %v682 = vsel %vm542, %v489, 0
    %v685 = vsel %vm542, %v490, 0
    %v688 = vsel %vm542, %v491, 0
    %v691 = vsel %vm542, %v492, 0
    %v694 = vsel %vm542, %v493, 0
    %696 = vmatprep.subr.mxu0 0.0
    %697 = vmatpush1.msra.mxu0 %v14
    %698 = vmatprep.subr.mxu0 0.0
    %699 = vmatpush1.msra.mxu0 %v15
    %700 = vmatprep.subr.mxu0 0.0
    %701 = vmatpush1.msra.mxu0 0.0
    %702 = vmatprep.subr.mxu0 0.0
    %703 = vmatpush1.msra.mxu0 0.0
    %704 = vmatprep.subr.mxu0 0.0
    %705 = vmatpush1.msra.mxu0 0.0
    %706 = vmatprep.subr.mxu0 0.0
    %707 = vmatpush1.msra.mxu0 0.0
    %708 = vmatprep.subr.mxu0 0.0
    %709 = vmatpush1.msra.mxu0 0.0
    %710 = vmatprep.subr.mxu0 0.0
    %711 = vmatpush1.msra.mxu0 0.0
    %712 = vmatprep.subr.mxu0 0.0
    %713 = vmatpush1.msra.mxu0 0.0
    %714 = vmatprep.subr.mxu0 0.0
    %715 = vmatpush1.msra.mxu0 0.0
    %716 = vmatprep.subr.mxu0 0.0
    %717 = vmatpush1.msra.mxu0 0.0
    %718 = vmatprep.subr.mxu0 0.0
    %719 = vmatpush1.msra.mxu0 0.0
    %720 = vmatprep.subr.mxu0 0.0
    %721 = vmatpush1.msra.mxu0 0.0
    %722 = vmatprep.subr.mxu0 0.0
    %723 = vmatpush1.msra.mxu0 0.0
    %724 = vmatprep.subr.mxu0 0.0
    %725 = vmatpush1.msra.mxu0 0.0
    %726 = vmatprep.subr.mxu0 0.0
    %727 = vmatpush1.msra.mxu0 0.0
    %728 = vmatprep.subr.mxu0 0.0
    %729 = vmatpush1.msra.mxu0 0.0
    %730 = vmatprep.subr.mxu0 0.0
    %731 = vmatpush1.msra.mxu0 0.0
    %732 = vmatprep.subr.mxu0 0.0
    %733 = vmatpush1.msra.mxu0 0.0
    %734 = vmatprep.subr.mxu0 0.0
    %735 = vmatpush1.msra.mxu0 0.0
    %736 = vmatprep.subr.mxu0 0.0
    %737 = vmatpush1.msra.mxu0 0.0
    %738 = vmatprep.subr.mxu0 0.0
    %739 = vmatpush1.msra.mxu0 0.0
    %740 = vmatprep.subr.mxu0 0.0
    %741 = vmatpush1.msra.mxu0 0.0
    %742 = vmatprep.subr.mxu0 0.0
    %743 = vmatpush1.msra.mxu0 0.0
    %744 = vmatprep.subr.mxu0 0.0
    %745 = vmatpush1.msra.mxu0 0.0
    %746 = vmatprep.subr.mxu0 0.0
    %747 = vmatpush1.msra.mxu0 0.0
    %748 = vmatprep.subr.mxu0 0.0
    %749 = vmatpush1.msra.mxu0 0.0
    %750 = vmatprep.subr.mxu0 0.0
    %751 = vmatpush1.msra.mxu0 0.0
    %752 = vmatprep.subr.mxu0 0.0
    %753 = vmatpush1.msra.mxu0 0.0
    %754 = vmatprep.subr.mxu0 0.0
    %755 = vmatpush1.msra.mxu0 0.0
    %756 = vmatprep.subr.mxu0 0.0
    %757 = vmatpush1.msra.mxu0 0.0
    %758 = vmatprep.subr.mxu0 0.0
    %759 = vmatpush1.msra.mxu0 0.0
    %760 = vmatprep.mubr.f32.mxu0 0.0
    %761 = vmatmul.mubr.f32.gmra.mrb[0].mxu0 %v673
    %v762 = vpop.f32.mrb[0].mxu0
    %v763 = vadd.f32 0.0, %v762
    %v764 = vpop.f32.mrb[0].mxu0
    %765 = vmatprep.mubr.f32.mxu0 0.0
    %766 = vmatmul.mubr.f32.gmra.mrb[0].mxu0 %v676
    %v767 = vpop.f32.mrb[0].mxu0
    %v768 = vadd.f32 0.0, %v767
    %v769 = vpop.f32.mrb[0].mxu0
    %770 = vmatprep.mubr.f32.mxu0 0.0
    %771 = vmatmul.mubr.f32.gmra.mrb[0].mxu0 %v679
    %v772 = vpop.f32.mrb[0].mxu0
    %v773 = vadd.f32 0.0, %v772
    %v774 = vpop.f32.mrb[0].mxu0
    %775 = vmatprep.mubr.f32.mxu0 0.0
    %776 = vmatmul.mubr.f32.gmra.mrb[0].mxu0 %v682
    %v777 = vpop.f32.mrb[0].mxu0
    %v778 = vadd.f32 0.0, %v777
    %v779 = vpop.f32.mrb[0].mxu0
    %780 = vmatprep.mubr.f32.mxu0 0.0
    %781 = vmatmul.mubr.f32.gmra.mrb[0].mxu0 %v685
    %v782 = vpop.f32.mrb[0].mxu0
    %v783 = vadd.f32 0.0, %v782
    %v784 = vpop.f32.mrb[0].mxu0
    %785 = vmatprep.mubr.f32.mxu0 0.0
    %786 = vmatmul.mubr.f32.gmra.mrb[0].mxu0 %v688
    %v787 = vpop.f32.mrb[0].mxu0
    %v788 = vadd.f32 0.0, %v787
    %v789 = vpop.f32.mrb[0].mxu0
    %790 = vmatprep.mubr.f32.mxu0 0.0
    %791 = vmatmul.mubr.f32.gmra.mrb[0].mxu0 %v691
    %v792 = vpop.f32.mrb[0].mxu0
    %v793 = vadd.f32 0.0, %v792
    %v794 = vpop.f32.mrb[0].mxu0
    %795 = vmatprep.mubr.f32.mxu0 0.0
    %796 = vmatmul.mubr.f32.gmra.mrb[0].mxu0 %v694
    %v797 = vpop.f32.mrb[0].mxu0
    %v798 = vadd.f32 0.0, %v797
    %v799 = vpop.f32.mrb[0].mxu0
    %800 = vdwg.mxu0
    %v802 = vsel %vm542, %v494, 0
    %v805 = vsel %vm542, %v495, 0
    %v808 = vsel %vm542, %v496, 0
    %v811 = vsel %vm542, %v497, 0
    %v814 = vsel %vm542, %v498, 0
    %v817 = vsel %vm542, %v499, 0
    %v820 = vsel %vm542, %v500, 0
    %v823 = vsel %vm542, %v501, 0
    %825 = vmatprep.subr.mxu0 0.0
    %826 = vmatpush1.msra.mxu0 %v16
    %827 = vmatprep.subr.mxu0 0.0
    %828 = vmatpush1.msra.mxu0 %v17
    %829 = vmatprep.subr.mxu0 0.0
    %830 = vmatpush1.msra.mxu0 0.0
    %831 = vmatprep.subr.mxu0 0.0
    %832 = vmatpush1.msra.mxu0 0.0
    %833 = vmatprep.subr.mxu0 0.0
    %834 = vmatpush1.msra.mxu0 0.0
    %835 = vmatprep.subr.mxu0 0.0
    %836 = vmatpush1.msra.mxu0 0.0
    %837 = vmatprep.subr.mxu0 0.0
    %838 = vmatpush1.msra.mxu0 0.0
    %839 = vmatprep.subr.mxu0 0.0
    %840 = vmatpush1.msra.mxu0 0.0
    %841 = vmatprep.subr.mxu0 0.0
    %842 = vmatpush1.msra.mxu0 0.0
    %843 = vmatprep.subr.mxu0 0.0
    %844 = vmatpush1.msra.mxu0 0.0
    %845 = vmatprep.subr.mxu0 0.0
    %846 = vmatpush1.msra.mxu0 0.0
    %847 = vmatprep.subr.mxu0 0.0
    %848 = vmatpush1.msra.mxu0 0.0
    %849 = vmatprep.subr.mxu0 0.0
    %850 = vmatpush1.msra.mxu0 0.0
    %851 = vmatprep.subr.mxu0 0.0
    %852 = vmatpush1.msra.mxu0 0.0
    %853 = vmatprep.subr.mxu0 0.0
    %854 = vmatpush1.msra.mxu0 0.0
    %855 = vmatprep.subr.mxu0 0.0
    %856 = vmatpush1.msra.mxu0 0.0
    %857 = vmatprep.subr.mxu0 0.0
    %858 = vmatpush1.msra.mxu0 0.0
    %859 = vmatprep.subr.mxu0 0.0
    %860 = vmatpush1.msra.mxu0 0.0
    %861 = vmatprep.subr.mxu0 0.0
    %862 = vmatpush1.msra.mxu0 0.0
    %863 = vmatprep.subr.mxu0 0.0
    %864 = vmatpush1.msra.mxu0 0.0
    %865 = vmatprep.subr.mxu0 0.0
    %866 = vmatpush1.msra.mxu0 0.0
    %867 = vmatprep.subr.mxu0 0.0
    %868 = vmatpush1.msra.mxu0 0.0
    %869 = vmatprep.subr.mxu0 0.0
    %870 = vmatpush1.msra.mxu0 0.0
    %871 = vmatprep.subr.mxu0 0.0
    %872 = vmatpush1.msra.mxu0 0.0
    %873 = vmatprep.subr.mxu0 0.0
    %874 = vmatpush1.msra.mxu0 0.0
    %875 = vmatprep.subr.mxu0 0.0
    %876 = vmatpush1.msra.mxu0 0.0
    %877 = vmatprep.subr.mxu0 0.0
    %878 = vmatpush1.msra.mxu0 0.0
    %879 = vmatprep.subr.mxu0 0.0
    %880 = vmatpush1.msra.mxu0 0.0
    %881 = vmatprep.subr.mxu0 0.0
    %882 = vmatpush1.msra.mxu0 0.0
    %883 = vmatprep.subr.mxu0 0.0
    %884 = vmatpush1.msra.mxu0 0.0
    %885 = vmatprep.subr.mxu0 0.0
    %886 = vmatpush1.msra.mxu0 0.0
    %887 = vmatprep.subr.mxu0 0.0
    %888 = vmatpush1.msra.mxu0 0.0
    %889 = vmatprep.mubr.f32.mxu0 0.0
    %890 = vmatmul.mubr.f32.gmra.mrb[0].mxu0 %v802
    %v891 = vpop.f32.mrb[0].mxu0
    %v892 = vadd.f32 0.0, %v891
    %v893 = vpop.f32.mrb[0].mxu0
    %894 = vmatprep.mubr.f32.mxu0 0.0
    %895 = vmatmul.mubr.f32.gmra.mrb[0].mxu0 %v805
    %v896 = vpop.f32.mrb[0].mxu0
    %v897 = vadd.f32 0.0, %v896
    %v898 = vpop.f32.mrb[0].mxu0
    %899 = vmatprep.mubr.f32.mxu0 0.0
    %900 = vmatmul.mubr.f32.gmra.mrb[0].mxu0 %v808
    %v901 = vpop.f32.mrb[0].mxu0
    %v902 = vadd.f32 0.0, %v901
    %v903 = vpop.f32.mrb[0].mxu0
    %904 = vmatprep.mubr.f32.mxu0 0.0
    %905 = vmatmul.mubr.f32.gmra.mrb[0].mxu0 %v811
    %v906 = vpop.f32.mrb[0].mxu0
    %v907 = vadd.f32 0.0, %v906
    %v908 = vpop.f32.mrb[0].mxu0
    %909 = vmatprep.mubr.f32.mxu0 0.0
    %910 = vmatmul.mubr.f32.gmra.mrb[0].mxu0 %v814
    %v911 = vpop.f32.mrb[0].mxu0
    %v912 = vadd.f32 0.0, %v911
    %v913 = vpop.f32.mrb[0].mxu0
    %914 = vmatprep.mubr.f32.mxu0 0.0
    %915 = vmatmul.mubr.f32.gmra.mrb[0].mxu0 %v817
    %v916 = vpop.f32.mrb[0].mxu0
    %v917 = vadd.f32 0.0, %v916
    %v918 = vpop.f32.mrb[0].mxu0
    %919 = vmatprep.mubr.f32.mxu0 0.0
    %920 = vmatmul.mubr.f32.gmra.mrb[0].mxu0 %v820
    %v921 = vpop.f32.mrb[0].mxu0
    %v922 = vadd.f32 0.0, %v921
    %v923 = vpop.f32.mrb[0].mxu0
    %924 = vmatprep.mubr.f32.mxu0 0.0
    %925 = vmatmul.mubr.f32.gmra.mrb[0].mxu0 %v823
    %v926 = vpop.f32.mrb[0].mxu0
    %v927 = vadd.f32 0.0, %v926
    %v928 = vpop.f32.mrb[0].mxu0
    %929 = vdwg.mxu0
    %v931 = vsel %vm542, %v502, 0
    %v934 = vsel %vm542, %v503, 0
    %v937 = vsel %vm542, %v504, 0
    %v940 = vsel %vm542, %v505, 0
    %v943 = vsel %vm542, %v506, 0
    %v946 = vsel %vm542, %v507, 0
    %v949 = vsel %vm542, %v508, 0
    %v952 = vsel %vm542, %v509, 0
    %954 = vmatprep.subr.mxu0 0.0
    %955 = vmatpush1.msra.mxu0 %v18
    %956 = vmatprep.subr.mxu0 0.0
    %957 = vmatpush1.msra.mxu0 %v19
    %958 = vmatprep.subr.mxu0 0.0
    %959 = vmatpush1.msra.mxu0 0.0
    %960 = vmatprep.subr.mxu0 0.0
    %961 = vmatpush1.msra.mxu0 0.0
    %962 = vmatprep.subr.mxu0 0.0
    %963 = vmatpush1.msra.mxu0 0.0
    %964 = vmatprep.subr.mxu0 0.0
    %965 = vmatpush1.msra.mxu0 0.0
    %966 = vmatprep.subr.mxu0 0.0
    %967 = vmatpush1.msra.mxu0 0.0
    %968 = vmatprep.subr.mxu0 0.0
    %969 = vmatpush1.msra.mxu0 0.0
    %970 = vmatprep.subr.mxu0 0.0
    %971 = vmatpush1.msra.mxu0 0.0
    %972 = vmatprep.subr.mxu0 0.0
    %973 = vmatpush1.msra.mxu0 0.0
    %974 = vmatprep.subr.mxu0 0.0
    %975 = vmatpush1.msra.mxu0 0.0
    %976 = vmatprep.subr.mxu0 0.0
    %977 = vmatpush1.msra.mxu0 0.0
    %978 = vmatprep.subr.mxu0 0.0
    %979 = vmatpush1.msra.mxu0 0.0
    %980 = vmatprep.subr.mxu0 0.0
    %981 = vmatpush1.msra.mxu0 0.0
    %982 = vmatprep.subr.mxu0 0.0
    %983 = vmatpush1.msra.mxu0 0.0
    %984 = vmatprep.subr.mxu0 0.0
    %985 = vmatpush1.msra.mxu0 0.0
    %986 = vmatprep.subr.mxu0 0.0
    %987 = vmatpush1.msra.mxu0 0.0
    %988 = vmatprep.subr.mxu0 0.0
    %989 = vmatpush1.msra.mxu0 0.0
    %990 = vmatprep.subr.mxu0 0.0
    %991 = vmatpush1.msra.mxu0 0.0
    %992 = vmatprep.subr.mxu0 0.0
    %993 = vmatpush1.msra.mxu0 0.0
    %994 = vmatprep.subr.mxu0 0.0
    %995 = vmatpush1.msra.mxu0 0.0
    %996 = vmatprep.subr.mxu0 0.0
    %997 = vmatpush1.msra.mxu0 0.0
    %998 = vmatprep.subr.mxu0 0.0
    %999 = vmatpush1.msra.mxu0 0.0
    %1000 = vmatprep.subr.mxu0 0.0
    %1001 = vmatpush1.msra.mxu0 0.0
    %1002 = vmatprep.subr.mxu0 0.0
    %1003 = vmatpush1.msra.mxu0 0.0
    %1004 = vmatprep.subr.mxu0 0.0
    %1005 = vmatpush1.msra.mxu0 0.0
    %1006 = vmatprep.subr.mxu0 0.0
    %1007 = vmatpush1.msra.mxu0 0.0
    %1008 = vmatprep.subr.mxu0 0.0
    %1009 = vmatpush1.msra.mxu0 0.0
    %1010 = vmatprep.subr.mxu0 0.0
    %1011 = vmatpush1.msra.mxu0 0.0
    %1012 = vmatprep.subr.mxu0 0.0
    %1013 = vmatpush1.msra.mxu0 0.0
    %1014 = vmatprep.subr.mxu0 0.0
    %1015 = vmatpush1.msra.mxu0 0.0
    %1016 = vmatprep.subr.mxu0 0.0
    %1017 = vmatpush1.msra.mxu0 0.0
    %1018 = vmatprep.mubr.f32.mxu0 0.0
    %1019 = vmatmul.mubr.f32.gmra.mrb[0].mxu0 %v931
    %v1020 = vpop.f32.mrb[0].mxu0
    %v1021 = vadd.f32 0.0, %v1020
    %v1022 = vpop.f32.mrb[0].mxu0
    %1023 = vmatprep.mubr.f32.mxu0 0.0
    %1024 = vmatmul.mubr.f32.gmra.mrb[0].mxu0 %v934
    %v1025 = vpop.f32.mrb[0].mxu0
    %v1026 = vadd.f32 0.0, %v1025
    %v1027 = vpop.f32.mrb[0].mxu0
    %1028 = vmatprep.mubr.f32.mxu0 0.0
    %1029 = vmatmul.mubr.f32.gmra.mrb[0].mxu0 %v937
    %v1030 = vpop.f32.mrb[0].mxu0
    %v1031 = vadd.f32 0.0, %v1030
    %v1032 = vpop.f32.mrb[0].mxu0
    %1033 = vmatprep.mubr.f32.mxu0 0.0
    %1034 = vmatmul.mubr.f32.gmra.mrb[0].mxu0 %v940
    %v1035 = vpop.f32.mrb[0].mxu0
    %v1036 = vadd.f32 0.0, %v1035
    %v1037 = vpop.f32.mrb[0].mxu0
    %1038 = vmatprep.mubr.f32.mxu0 0.0
    %1039 = vmatmul.mubr.f32.gmra.mrb[0].mxu0 %v943
    %v1040 = vpop.f32.mrb[0].mxu0
    %v1041 = vadd.f32 0.0, %v1040
    %v1042 = vpop.f32.mrb[0].mxu0
    %1043 = vmatprep.mubr.f32.mxu0 0.0
    %1044 = vmatmul.mubr.f32.gmra.mrb[0].mxu0 %v946
    %v1045 = vpop.f32.mrb[0].mxu0
    %v1046 = vadd.f32 0.0, %v1045
    %v1047 = vpop.f32.mrb[0].mxu0
    %1048 = vmatprep.mubr.f32.mxu0 0.0
    %1049 = vmatmul.mubr.f32.gmra.mrb[0].mxu0 %v949
    %v1050 = vpop.f32.mrb[0].mxu0
    %v1051 = vadd.f32 0.0, %v1050
    %v1052 = vpop.f32.mrb[0].mxu0
    %1053 = vmatprep.mubr.f32.mxu0 0.0
    %1054 = vmatmul.mubr.f32.gmra.mrb[0].mxu0 %v952
    %v1055 = vpop.f32.mrb[0].mxu0
    %v1056 = vadd.f32 0.0, %v1055
    %v1057 = vpop.f32.mrb[0].mxu0
    %1058 = vdwg.mxu0
    %v1060 = vsel %vm542, %v510, 0
    %v1063 = vsel %vm542, %v511, 0
    %v1066 = vsel %vm542, %v512, 0
    %v1069 = vsel %vm542, %v513, 0
    %v1072 = vsel %vm542, %v514, 0
    %v1075 = vsel %vm542, %v515, 0
    %v1078 = vsel %vm542, %v516, 0
    %v1081 = vsel %vm542, %v517, 0
    %1083 = vmatprep.subr.mxu0 0.0
    %1084 = vmatpush1.msra.mxu0 %v20
    %1085 = vmatprep.subr.mxu0 0.0
    %1086 = vmatpush1.msra.mxu0 %v21
    %1087 = vmatprep.subr.mxu0 0.0
    %1088 = vmatpush1.msra.mxu0 0.0
    %1089 = vmatprep.subr.mxu0 0.0
    %1090 = vmatpush1.msra.mxu0 0.0
    %1091 = vmatprep.subr.mxu0 0.0
    %1092 = vmatpush1.msra.mxu0 0.0
    %1093 = vmatprep.subr.mxu0 0.0
    %1094 = vmatpush1.msra.mxu0 0.0
    %1095 = vmatprep.subr.mxu0 0.0
    %1096 = vmatpush1.msra.mxu0 0.0
    %1097 = vmatprep.subr.mxu0 0.0
    %1098 = vmatpush1.msra.mxu0 0.0
    %1099 = vmatprep.subr.mxu0 0.0
    %1100 = vmatpush1.msra.mxu0 0.0
    %1101 = vmatprep.subr.mxu0 0.0
    %1102 = vmatpush1.msra.mxu0 0.0
    %1103 = vmatprep.subr.mxu0 0.0
    %1104 = vmatpush1.msra.mxu0 0.0
    %1105 = vmatprep.subr.mxu0 0.0
    %1106 = vmatpush1.msra.mxu0 0.0
    %1107 = vmatprep.subr.mxu0 0.0
    %1108 = vmatpush1.msra.mxu0 0.0
    %1109 = vmatprep.subr.mxu0 0.0
    %1110 = vmatpush1.msra.mxu0 0.0
    %1111 = vmatprep.subr.mxu0 0.0
    %1112 = vmatpush1.msra.mxu0 0.0
    %1113 = vmatprep.subr.mxu0 0.0
    %1114 = vmatpush1.msra.mxu0 0.0
    %1115 = vmatprep.subr.mxu0 0.0
    %1116 = vmatpush1.msra.mxu0 0.0
    %1117 = vmatprep.subr.mxu0 0.0
    %1118 = vmatpush1.msra.mxu0 0.0
    %1119 = vmatprep.subr.mxu0 0.0
    %1120 = vmatpush1.msra.mxu0 0.0
    %1121 = vmatprep.subr.mxu0 0.0
    %1122 = vmatpush1.msra.mxu0 0.0
    %1123 = vmatprep.subr.mxu0 0.0
    %1124 = vmatpush1.msra.mxu0 0.0
    %1125 = vmatprep.subr.mxu0 0.0
    %1126 = vmatpush1.msra.mxu0 0.0
    %1127 = vmatprep.subr.mxu0 0.0
    %1128 = vmatpush1.msra.mxu0 0.0
    %1129 = vmatprep.subr.mxu0 0.0
    %1130 = vmatpush1.msra.mxu0 0.0
    %1131 = vmatprep.subr.mxu0 0.0
    %1132 = vmatpush1.msra.mxu0 0.0
    %1133 = vmatprep.subr.mxu0 0.0
    %1134 = vmatpush1.msra.mxu0 0.0
    %1135 = vmatprep.subr.mxu0 0.0
    %1136 = vmatpush1.msra.mxu0 0.0
    %1137 = vmatprep.subr.mxu0 0.0
    %1138 = vmatpush1.msra.mxu0 0.0
    %1139 = vmatprep.subr.mxu0 0.0
    %1140 = vmatpush1.msra.mxu0 0.0
    %1141 = vmatprep.subr.mxu0 0.0
    %1142 = vmatpush1.msra.mxu0 0.0
    %1143 = vmatprep.subr.mxu0 0.0
    %1144 = vmatpush1.msra.mxu0 0.0
    %1145 = vmatprep.subr.mxu0 0.0
    %1146 = vmatpush1.msra.mxu0 0.0
    %1147 = vmatprep.mubr.f32.mxu0 0.0
    %1148 = vmatmul.mubr.f32.gmra.mrb[0].mxu0 %v1060
    %v1149 = vpop.f32.mrb[0].mxu0
    %v1150 = vadd.f32 0.0, %v1149
    %v1151 = vpop.f32.mrb[0].mxu0
    %1152 = vmatprep.mubr.f32.mxu0 0.0
    %1153 = vmatmul.mubr.f32.gmra.mrb[0].mxu0 %v1063
    %v1154 = vpop.f32.mrb[0].mxu0
    %v1155 = vadd.f32 0.0, %v1154
    %v1156 = vpop.f32.mrb[0].mxu0
    %1157 = vmatprep.mubr.f32.mxu0 0.0
    %1158 = vmatmul.mubr.f32.gmra.mrb[0].mxu0 %v1066
    %v1159 = vpop.f32.mrb[0].mxu0
    %v1160 = vadd.f32 0.0, %v1159
    %v1161 = vpop.f32.mrb[0].mxu0
    %1162 = vmatprep.mubr.f32.mxu0 0.0
    %1163 = vmatmul.mubr.f32.gmra.mrb[0].mxu0 %v1069
    %v1164 = vpop.f32.mrb[0].mxu0
    %v1165 = vadd.f32 0.0, %v1164
    %v1166 = vpop.f32.mrb[0].mxu0
    %1167 = vmatprep.mubr.f32.mxu0 0.0
    %1168 = vmatmul.mubr.f32.gmra.mrb[0].mxu0 %v1072
    %v1169 = vpop.f32.mrb[0].mxu0
    %v1170 = vadd.f32 0.0, %v1169
    %v1171 = vpop.f32.mrb[0].mxu0
    %1172 = vmatprep.mubr.f32.mxu0 0.0
    %1173 = vmatmul.mubr.f32.gmra.mrb[0].mxu0 %v1075
    %v1174 = vpop.f32.mrb[0].mxu0
    %v1175 = vadd.f32 0.0, %v1174
    %v1176 = vpop.f32.mrb[0].mxu0
    %1177 = vmatprep.mubr.f32.mxu0 0.0
    %1178 = vmatmul.mubr.f32.gmra.mrb[0].mxu0 %v1078
    %v1179 = vpop.f32.mrb[0].mxu0
    %v1180 = vadd.f32 0.0, %v1179
    %v1181 = vpop.f32.mrb[0].mxu0
    %1182 = vmatprep.mubr.f32.mxu0 0.0
    %1183 = vmatmul.mubr.f32.gmra.mrb[0].mxu0 %v1081
    %v1184 = vpop.f32.mrb[0].mxu0
    %v1185 = vadd.f32 0.0, %v1184
    %v1186 = vpop.f32.mrb[0].mxu0
    %1187 = vdwg.mxu0
    %v1189 = vsel %vm542, %v518, 0
    %v1192 = vsel %vm542, %v519, 0
    %v1195 = vsel %vm542, %v520, 0
    %v1198 = vsel %vm542, %v521, 0
    %v1201 = vsel %vm542, %v522, 0
    %v1204 = vsel %vm542, %v523, 0
    %v1207 = vsel %vm542, %v524, 0
    %v1210 = vsel %vm542, %v525, 0
    %1212 = vmatprep.subr.mxu0 0.0
    %1213 = vmatpush1.msra.mxu0 %v22
    %1214 = vmatprep.subr.mxu0 0.0
    %1215 = vmatpush1.msra.mxu0 %v23
    %1216 = vmatprep.subr.mxu0 0.0
    %1217 = vmatpush1.msra.mxu0 0.0
    %1218 = vmatprep.subr.mxu0 0.0
    %1219 = vmatpush1.msra.mxu0 0.0
    %1220 = vmatprep.subr.mxu0 0.0
    %1221 = vmatpush1.msra.mxu0 0.0
    %1222 = vmatprep.subr.mxu0 0.0
    %1223 = vmatpush1.msra.mxu0 0.0
    %1224 = vmatprep.subr.mxu0 0.0
    %1225 = vmatpush1.msra.mxu0 0.0
    %1226 = vmatprep.subr.mxu0 0.0
    %1227 = vmatpush1.msra.mxu0 0.0
    %1228 = vmatprep.subr.mxu0 0.0
    %1229 = vmatpush1.msra.mxu0 0.0
    %1230 = vmatprep.subr.mxu0 0.0
    %1231 = vmatpush1.msra.mxu0 0.0
    %1232 = vmatprep.subr.mxu0 0.0
    %1233 = vmatpush1.msra.mxu0 0.0
    %1234 = vmatprep.subr.mxu0 0.0
    %1235 = vmatpush1.msra.mxu0 0.0
    %1236 = vmatprep.subr.mxu0 0.0
    %1237 = vmatpush1.msra.mxu0 0.0
    %1238 = vmatprep.subr.mxu0 0.0
    %1239 = vmatpush1.msra.mxu0 0.0
    %1240 = vmatprep.subr.mxu0 0.0
    %1241 = vmatpush1.msra.mxu0 0.0
    %1242 = vmatprep.subr.mxu0 0.0
    %1243 = vmatpush1.msra.mxu0 0.0
    %1244 = vmatprep.subr.mxu0 0.0
    %1245 = vmatpush1.msra.mxu0 0.0
    %1246 = vmatprep.subr.mxu0 0.0
    %1247 = vmatpush1.msra.mxu0 0.0
    %1248 = vmatprep.subr.mxu0 0.0
    %1249 = vmatpush1.msra.mxu0 0.0
    %1250 = vmatprep.subr.mxu0 0.0
    %1251 = vmatpush1.msra.mxu0 0.0
    %1252 = vmatprep.subr.mxu0 0.0
    %1253 = vmatpush1.msra.mxu0 0.0
    %1254 = vmatprep.subr.mxu0 0.0
    %1255 = vmatpush1.msra.mxu0 0.0
    %1256 = vmatprep.subr.mxu0 0.0
    %1257 = vmatpush1.msra.mxu0 0.0
    %1258 = vmatprep.subr.mxu0 0.0
    %1259 = vmatpush1.msra.mxu0 0.0
    %1260 = vmatprep.subr.mxu0 0.0
    %1261 = vmatpush1.msra.mxu0 0.0
    %1262 = vmatprep.subr.mxu0 0.0
    %1263 = vmatpush1.msra.mxu0 0.0
    %1264 = vmatprep.subr.mxu0 0.0
    %1265 = vmatpush1.msra.mxu0 0.0
    %1266 = vmatprep.subr.mxu0 0.0
    %1267 = vmatpush1.msra.mxu0 0.0
    %1268 = vmatprep.subr.mxu0 0.0
    %1269 = vmatpush1.msra.mxu0 0.0
    %1270 = vmatprep.subr.mxu0 0.0
    %1271 = vmatpush1.msra.mxu0 0.0
    %1272 = vmatprep.subr.mxu0 0.0
    %1273 = vmatpush1.msra.mxu0 0.0
    %1274 = vmatprep.subr.mxu0 0.0
    %1275 = vmatpush1.msra.mxu0 0.0
    %1276 = vmatprep.mubr.f32.mxu0 0.0
    %1277 = vmatmul.mubr.f32.gmra.mrb[0].mxu0 %v1189
    %v1278 = vpop.f32.mrb[0].mxu0
    %v1279 = vadd.f32 0.0, %v1278
    %v1280 = vpop.f32.mrb[0].mxu0
    %1281 = vmatprep.mubr.f32.mxu0 0.0
    %1282 = vmatmul.mubr.f32.gmra.mrb[0].mxu0 %v1192
    %v1283 = vpop.f32.mrb[0].mxu0
    %v1284 = vadd.f32 0.0, %v1283
    %v1285 = vpop.f32.mrb[0].mxu0
    %1286 = vmatprep.mubr.f32.mxu0 0.0
    %1287 = vmatmul.mubr.f32.gmra.mrb[0].mxu0 %v1195
    %v1288 = vpop.f32.mrb[0].mxu0
    %v1289 = vadd.f32 0.0, %v1288
    %v1290 = vpop.f32.mrb[0].mxu0
    %1291 = vmatprep.mubr.f32.mxu0 0.0
    %1292 = vmatmul.mubr.f32.gmra.mrb[0].mxu0 %v1198
    %v1293 = vpop.f32.mrb[0].mxu0
    %v1294 = vadd.f32 0.0, %v1293
    %v1295 = vpop.f32.mrb[0].mxu0
    %1296 = vmatprep.mubr.f32.mxu0 0.0
    %1297 = vmatmul.mubr.f32.gmra.mrb[0].mxu0 %v1201
    %v1298 = vpop.f32.mrb[0].mxu0
    %v1299 = vadd.f32 0.0, %v1298
    %v1300 = vpop.f32.mrb[0].mxu0
    %1301 = vmatprep.mubr.f32.mxu0 0.0
    %1302 = vmatmul.mubr.f32.gmra.mrb[0].mxu0 %v1204
    %v1303 = vpop.f32.mrb[0].mxu0
    %v1304 = vadd.f32 0.0, %v1303
    %v1305 = vpop.f32.mrb[0].mxu0
    %1306 = vmatprep.mubr.f32.mxu0 0.0
    %1307 = vmatmul.mubr.f32.gmra.mrb[0].mxu0 %v1207
    %v1308 = vpop.f32.mrb[0].mxu0
    %v1309 = vadd.f32 0.0, %v1308
    %v1310 = vpop.f32.mrb[0].mxu0
    %1311 = vmatprep.mubr.f32.mxu0 0.0
    %1312 = vmatmul.mubr.f32.gmra.mrb[0].mxu0 %v1210
    %v1313 = vpop.f32.mrb[0].mxu0
    %v1314 = vadd.f32 0.0, %v1313
    %v1315 = vpop.f32.mrb[0].mxu0
    %1316 = vdwg.mxu0
    %v1318 = vsel %vm542, %v526, 0
    %v1321 = vsel %vm542, %v527, 0
    %v1324 = vsel %vm542, %v528, 0
    %v1327 = vsel %vm542, %v529, 0
    %v1330 = vsel %vm542, %v530, 0
    %v1333 = vsel %vm542, %v531, 0
    %v1336 = vsel %vm542, %v532, 0
    %v1339 = vsel %vm542, %v533, 0
    %1341 = vmatprep.subr.mxu0 0.0
    %1342 = vmatpush1.msra.mxu0 %v24
    %1343 = vmatprep.subr.mxu0 0.0
    %1344 = vmatpush1.msra.mxu0 %v25
    %1345 = vmatprep.subr.mxu0 0.0
    %1346 = vmatpush1.msra.mxu0 0.0
    %1347 = vmatprep.subr.mxu0 0.0
    %1348 = vmatpush1.msra.mxu0 0.0
    %1349 = vmatprep.subr.mxu0 0.0
    %1350 = vmatpush1.msra.mxu0 0.0
    %1351 = vmatprep.subr.mxu0 0.0
    %1352 = vmatpush1.msra.mxu0 0.0
    %1353 = vmatprep.subr.mxu0 0.0
    %1354 = vmatpush1.msra.mxu0 0.0
    %1355 = vmatprep.subr.mxu0 0.0
    %1356 = vmatpush1.msra.mxu0 0.0
    %1357 = vmatprep.subr.mxu0 0.0
    %1358 = vmatpush1.msra.mxu0 0.0
    %1359 = vmatprep.subr.mxu0 0.0
    %1360 = vmatpush1.msra.mxu0 0.0
    %1361 = vmatprep.subr.mxu0 0.0
    %1362 = vmatpush1.msra.mxu0 0.0
    %1363 = vmatprep.subr.mxu0 0.0
    %1364 = vmatpush1.msra.mxu0 0.0
    %1365 = vmatprep.subr.mxu0 0.0
    %1366 = vmatpush1.msra.mxu0 0.0
    %1367 = vmatprep.subr.mxu0 0.0
    %1368 = vmatpush1.msra.mxu0 0.0
    %1369 = vmatprep.subr.mxu0 0.0
    %1370 = vmatpush1.msra.mxu0 0.0
    %1371 = vmatprep.subr.mxu0 0.0
    %1372 = vmatpush1.msra.mxu0 0.0
    %1373 = vmatprep.subr.mxu0 0.0
    %1374 = vmatpush1.msra.mxu0 0.0
    %1375 = vmatprep.subr.mxu0 0.0
    %1376 = vmatpush1.msra.mxu0 0.0
    %1377 = vmatprep.subr.mxu0 0.0
    %1378 = vmatpush1.msra.mxu0 0.0
    %1379 = vmatprep.subr.mxu0 0.0
    %1380 = vmatpush1.msra.mxu0 0.0
    %1381 = vmatprep.subr.mxu0 0.0
    %1382 = vmatpush1.msra.mxu0 0.0
    %1383 = vmatprep.subr.mxu0 0.0
    %1384 = vmatpush1.msra.mxu0 0.0
    %1385 = vmatprep.subr.mxu0 0.0
    %1386 = vmatpush1.msra.mxu0 0.0
    %1387 = vmatprep.subr.mxu0 0.0
    %1388 = vmatpush1.msra.mxu0 0.0
    %1389 = vmatprep.subr.mxu0 0.0
    %1390 = vmatpush1.msra.mxu0 0.0
    %1391 = vmatprep.subr.mxu0 0.0
    %1392 = vmatpush1.msra.mxu0 0.0
    %1393 = vmatprep.subr.mxu0 0.0
    %1394 = vmatpush1.msra.mxu0 0.0
    %1395 = vmatprep.subr.mxu0 0.0
    %1396 = vmatpush1.msra.mxu0 0.0
    %1397 = vmatprep.subr.mxu0 0.0
    %1398 = vmatpush1.msra.mxu0 0.0
    %1399 = vmatprep.subr.mxu0 0.0
    %1400 = vmatpush1.msra.mxu0 0.0
    %1401 = vmatprep.subr.mxu0 0.0
    %1402 = vmatpush1.msra.mxu0 0.0
    %1403 = vmatprep.subr.mxu0 0.0
    %1404 = vmatpush1.msra.mxu0 0.0
    %1405 = vmatprep.mubr.f32.mxu0 0.0
    %1406 = vmatmul.mubr.f32.gmra.mrb[0].mxu0 %v1318
    %v1407 = vpop.f32.mrb[0].mxu0
    %v1408 = vadd.f32 0.0, %v1407
    %v1409 = vpop.f32.mrb[0].mxu0
    %1410 = vmatprep.mubr.f32.mxu0 0.0
    %1411 = vmatmul.mubr.f32.gmra.mrb[0].mxu0 %v1321
    %v1412 = vpop.f32.mrb[0].mxu0
    %v1413 = vadd.f32 0.0, %v1412
    %v1414 = vpop.f32.mrb[0].mxu0
    %1415 = vmatprep.mubr.f32.mxu0 0.0
    %1416 = vmatmul.mubr.f32.gmra.mrb[0].mxu0 %v1324
    %v1417 = vpop.f32.mrb[0].mxu0
    %v1418 = vadd.f32 0.0, %v1417
    %v1419 = vpop.f32.mrb[0].mxu0
    %1420 = vmatprep.mubr.f32.mxu0 0.0
    %1421 = vmatmul.mubr.f32.gmra.mrb[0].mxu0 %v1327
    %v1422 = vpop.f32.mrb[0].mxu0
    %v1423 = vadd.f32 0.0, %v1422
    %v1424 = vpop.f32.mrb[0].mxu0
    %1425 = vmatprep.mubr.f32.mxu0 0.0
    %1426 = vmatmul.mubr.f32.gmra.mrb[0].mxu0 %v1330
    %v1427 = vpop.f32.mrb[0].mxu0
    %v1428 = vadd.f32 0.0, %v1427
    %v1429 = vpop.f32.mrb[0].mxu0
    %1430 = vmatprep.mubr.f32.mxu0 0.0
    %1431 = vmatmul.mubr.f32.gmra.mrb[0].mxu0 %v1333
    %v1432 = vpop.f32.mrb[0].mxu0
    %v1433 = vadd.f32 0.0, %v1432
    %v1434 = vpop.f32.mrb[0].mxu0
    %1435 = vmatprep.mubr.f32.mxu0 0.0
    %1436 = vmatmul.mubr.f32.gmra.mrb[0].mxu0 %v1336
    %v1437 = vpop.f32.mrb[0].mxu0
    %v1438 = vadd.f32 0.0, %v1437
    %v1439 = vpop.f32.mrb[0].mxu0
    %1440 = vmatprep.mubr.f32.mxu0 0.0
    %1441 = vmatmul.mubr.f32.gmra.mrb[0].mxu0 %v1339
    %v1442 = vpop.f32.mrb[0].mxu0
    %v1443 = vadd.f32 0.0, %v1442
    %v1444 = vpop.f32.mrb[0].mxu0
    %1445 = vdwg.mxu0
    %v1447 = vsel %vm542, %v534, 0
    %v1450 = vsel %vm542, %v535, 0
    %v1453 = vsel %vm542, %v536, 0
    %v1456 = vsel %vm542, %v537, 0
    %v1459 = vsel %vm542, %v538, 0
    %v1462 = vsel %vm542, %v539, 0
    %v1465 = vsel %vm542, %v540, 0
    %v1468 = vsel %vm542, %v541, 0
    %1470 = vmatprep.subr.mxu0 0.0
    %1471 = vmatpush1.msra.mxu0 %v26
    %1472 = vmatprep.subr.mxu0 0.0
    %1473 = vmatpush1.msra.mxu0 %v27
    %1474 = vmatprep.subr.mxu0 0.0
    %1475 = vmatpush1.msra.mxu0 0.0
    %1476 = vmatprep.subr.mxu0 0.0
    %1477 = vmatpush1.msra.mxu0 0.0
    %1478 = vmatprep.subr.mxu0 0.0
    %1479 = vmatpush1.msra.mxu0 0.0
    %1480 = vmatprep.subr.mxu0 0.0
    %1481 = vmatpush1.msra.mxu0 0.0
    %1482 = vmatprep.subr.mxu0 0.0
    %1483 = vmatpush1.msra.mxu0 0.0
    %1484 = vmatprep.subr.mxu0 0.0
    %1485 = vmatpush1.msra.mxu0 0.0
    %1486 = vmatprep.subr.mxu0 0.0
    %1487 = vmatpush1.msra.mxu0 0.0
    %1488 = vmatprep.subr.mxu0 0.0
    %1489 = vmatpush1.msra.mxu0 0.0
    %1490 = vmatprep.subr.mxu0 0.0
    %1491 = vmatpush1.msra.mxu0 0.0
    %1492 = vmatprep.subr.mxu0 0.0
    %1493 = vmatpush1.msra.mxu0 0.0
    %1494 = vmatprep.subr.mxu0 0.0
    %1495 = vmatpush1.msra.mxu0 0.0
    %1496 = vmatprep.subr.mxu0 0.0
    %1497 = vmatpush1.msra.mxu0 0.0
    %1498 = vmatprep.subr.mxu0 0.0
    %1499 = vmatpush1.msra.mxu0 0.0
    %1500 = vmatprep.subr.mxu0 0.0
    %1501 = vmatpush1.msra.mxu0 0.0
    %1502 = vmatprep.subr.mxu0 0.0
    %1503 = vmatpush1.msra.mxu0 0.0
    %1504 = vmatprep.subr.mxu0 0.0
    %1505 = vmatpush1.msra.mxu0 0.0
    %1506 = vmatprep.subr.mxu0 0.0
    %1507 = vmatpush1.msra.mxu0 0.0
    %1508 = vmatprep.subr.mxu0 0.0
    %1509 = vmatpush1.msra.mxu0 0.0
    %1510 = vmatprep.subr.mxu0 0.0
    %1511 = vmatpush1.msra.mxu0 0.0
    %1512 = vmatprep.subr.mxu0 0.0
    %1513 = vmatpush1.msra.mxu0 0.0
    %1514 = vmatprep.subr.mxu0 0.0
    %1515 = vmatpush1.msra.mxu0 0.0
    %1516 = vmatprep.subr.mxu0 0.0
    %1517 = vmatpush1.msra.mxu0 0.0
    %1518 = vmatprep.subr.mxu0 0.0
    %1519 = vmatpush1.msra.mxu0 0.0
    %1520 = vmatprep.subr.mxu0 0.0
    %1521 = vmatpush1.msra.mxu0 0.0
    %1522 = vmatprep.subr.mxu0 0.0
    %1523 = vmatpush1.msra.mxu0 0.0
    %1524 = vmatprep.subr.mxu0 0.0
    %1525 = vmatpush1.msra.mxu0 0.0
    %1526 = vmatprep.subr.mxu0 0.0
    %1527 = vmatpush1.msra.mxu0 0.0
    %1528 = vmatprep.subr.mxu0 0.0
    %1529 = vmatpush1.msra.mxu0 0.0
    %1530 = vmatprep.subr.mxu0 0.0
    %1531 = vmatpush1.msra.mxu0 0.0
    %1532 = vmatprep.subr.mxu0 0.0
    %1533 = vmatpush1.msra.mxu0 0.0
    %1534 = vmatprep.mubr.f32.mxu0 0.0
    %1535 = vmatmul.mubr.f32.gmra.mrb[0].mxu0 %v1447
    %v1536 = vpop.f32.mrb[0].mxu0
    %v1537 = vadd.f32 0.0, %v1536
    %v1538 = vpop.f32.mrb[0].mxu0
    %1539 = vmatprep.mubr.f32.mxu0 0.0
    %1540 = vmatmul.mubr.f32.gmra.mrb[0].mxu0 %v1450
    %v1541 = vpop.f32.mrb[0].mxu0
    %v1542 = vadd.f32 0.0, %v1541
    %v1543 = vpop.f32.mrb[0].mxu0
    %1544 = vmatprep.mubr.f32.mxu0 0.0
    %1545 = vmatmul.mubr.f32.gmra.mrb[0].mxu0 %v1453
    %v1546 = vpop.f32.mrb[0].mxu0
    %v1547 = vadd.f32 0.0, %v1546
    %v1548 = vpop.f32.mrb[0].mxu0
    %1549 = vmatprep.mubr.f32.mxu0 0.0
    %1550 = vmatmul.mubr.f32.gmra.mrb[0].mxu0 %v1456
    %v1551 = vpop.f32.mrb[0].mxu0
    %v1552 = vadd.f32 0.0, %v1551
    %v1553 = vpop.f32.mrb[0].mxu0
    %1554 = vmatprep.mubr.f32.mxu0 0.0
    %1555 = vmatmul.mubr.f32.gmra.mrb[0].mxu0 %v1459
    %v1556 = vpop.f32.mrb[0].mxu0
    %v1557 = vadd.f32 0.0, %v1556
    %v1558 = vpop.f32.mrb[0].mxu0
    %1559 = vmatprep.mubr.f32.mxu0 0.0
    %1560 = vmatmul.mubr.f32.gmra.mrb[0].mxu0 %v1462
    %v1561 = vpop.f32.mrb[0].mxu0
    %v1562 = vadd.f32 0.0, %v1561
    %v1563 = vpop.f32.mrb[0].mxu0
    %1564 = vmatprep.mubr.f32.mxu0 0.0
    %1565 = vmatmul.mubr.f32.gmra.mrb[0].mxu0 %v1465
    %v1566 = vpop.f32.mrb[0].mxu0
    %v1567 = vadd.f32 0.0, %v1566
    %v1568 = vpop.f32.mrb[0].mxu0
    %1569 = vmatprep.mubr.f32.mxu0 0.0
    %1570 = vmatmul.mubr.f32.gmra.mrb[0].mxu0 %v1468
    %v1571 = vpop.f32.mrb[0].mxu0
    %v1572 = vadd.f32 0.0, %v1571
    %v1573 = vpop.f32.mrb[0].mxu0
    %1574 = vdwg.mxu0
    %v1575 = vsel %vm92, 1, 0
    %v1576 = vsel %vm93, 1, 0
    %v1577 = vsel %vm94, 1, 0
    %v1578 = vsel %vm95, 1, 0
    %v1579 = vsel %vm96, 1, 0
    %v1580 = vsel %vm97, 1, 0
    %v1581 = vsel %vm98, 1, 0
    %v1582 = vsel %vm99, 1, 0
    %v1583 = vsel %vm100, 1, 0
    %v1584 = vsel %vm101, 1, 0
    %v1585 = vsel %vm102, 1, 0
    %v1586 = vsel %vm103, 1, 0
    %v1587 = vsel %vm104, 1, 0
    %v1588 = vsel %vm105, 1, 0
    %v1589 = vsel %vm106, 1, 0
    %v1590 = vsel %vm107, 1, 0
    %v1591 = vsel %vm108, 1, 0
    %v1592 = vsel %vm109, 1, 0
    %v1593 = vsel %vm110, 1, 0
    %v1594 = vsel %vm111, 1, 0
    %v1595 = vsel %vm112, 1, 0
    %v1596 = vsel %vm113, 1, 0
    %v1597 = vsel %vm114, 1, 0
    %v1598 = vsel %vm115, 1, 0
    %v1599 = vsel %vm116, 1, 0
    %v1600 = vsel %vm117, 1, 0
    %v1601 = vsel %vm118, 1, 0
    %v1602 = vsel %vm119, 1, 0
    %v1603 = vsel %vm120, 1, 0
    %v1604 = vsel %vm121, 1, 0
    %v1605 = vsel %vm122, 1, 0
    %v1606 = vsel %vm123, 1, 0
    %v1607 = vsel %vm124, 1, 0
    %v1608 = vsel %vm125, 1, 0
    %v1609 = vsel %vm126, 1, 0
    %v1610 = vsel %vm127, 1, 0
    %v1611 = vsel %vm128, 1, 0
    %v1612 = vsel %vm129, 1, 0
    %v1613 = vsel %vm130, 1, 0
    %v1614 = vsel %vm131, 1, 0
    %v1615 = vsel %vm132, 1, 0
    %v1616 = vsel %vm133, 1, 0
    %v1617 = vsel %vm134, 1, 0
    %v1618 = vsel %vm135, 1, 0
    %v1619 = vsel %vm136, 1, 0
    %v1620 = vsel %vm137, 1, 0
    %v1621 = vsel %vm138, 1, 0
    %v1622 = vsel %vm139, 1, 0
    %v1623 = vsel %vm140, 1, 0
    %v1624 = vsel %vm141, 1, 0
    %v1625 = vsel %vm142, 1, 0
    %v1626 = vsel %vm143, 1, 0
    %v1627 = vsel %vm144, 1, 0
    %v1628 = vsel %vm145, 1, 0
    %v1629 = vsel %vm146, 1, 0
    %v1630 = vsel %vm147, 1, 0
    %v1631 = vsel %vm148, 1, 0
    %v1632 = vsel %vm149, 1, 0
    %v1633 = vsel %vm150, 1, 0
    %v1634 = vsel %vm151, 1, 0
    %v1635 = vsel %vm152, 1, 0
    %v1636 = vsel %vm153, 1, 0
    %v1637 = vsel %vm154, 1, 0
    %v1638 = vsel %vm155, 1, 0
    %1639 = vset.pattern.permute.xlu0 0
    %1640 = vperm.xlu0 %1639, %v1575
    %v1641 = vpop.permute.xlu0 %1640
    %1642 = vset.pattern.permute.xlu0 0
    %1643 = vperm.xlu0 %1642, %v1576
    %v1644 = vpop.permute.xlu0 %1643
    %1645 = vset.pattern.permute.xlu0 0
    %1646 = vperm.xlu0 %1645, %v1577
    %v1647 = vpop.permute.xlu0 %1646
    %1648 = vset.pattern.permute.xlu0 0
    %1649 = vperm.xlu0 %1648, %v1578
    %v1650 = vpop.permute.xlu0 %1649
    %1651 = vset.pattern.permute.xlu0 0
    %1652 = vperm.xlu0 %1651, %v1579
    %v1653 = vpop.permute.xlu0 %1652
    %1654 = vset.pattern.permute.xlu0 0
    %1655 = vperm.xlu0 %1654, %v1580
    %v1656 = vpop.permute.xlu0 %1655
    %1657 = vset.pattern.permute.xlu0 0
    %1658 = vperm.xlu0 %1657, %v1581
    %v1659 = vpop.permute.xlu0 %1658
    %1660 = vset.pattern.permute.xlu0 0
    %1661 = vperm.xlu0 %1660, %v1582
    %v1662 = vpop.permute.xlu0 %1661
    %1663 = vset.pattern.permute.xlu0 0
    %1664 = vperm.xlu0 %1663, %v1583
    %v1665 = vpop.permute.xlu0 %1664
    %1666 = vset.pattern.permute.xlu0 0
    %1667 = vperm.xlu0 %1666, %v1584
    %v1668 = vpop.permute.xlu0 %1667
    %1669 = vset.pattern.permute.xlu0 0
    %1670 = vperm.xlu0 %1669, %v1585
    %v1671 = vpop.permute.xlu0 %1670
    %1672 = vset.pattern.permute.xlu0 0
    %1673 = vperm.xlu0 %1672, %v1586
    %v1674 = vpop.permute.xlu0 %1673
    %1675 = vset.pattern.permute.xlu0 0
    %1676 = vperm.xlu0 %1675, %v1587
    %v1677 = vpop.permute.xlu0 %1676
    %1678 = vset.pattern.permute.xlu0 0
    %1679 = vperm.xlu0 %1678, %v1588
    %v1680 = vpop.permute.xlu0 %1679
    %1681 = vset.pattern.permute.xlu0 0
    %1682 = vperm.xlu0 %1681, %v1589
    %v1683 = vpop.permute.xlu0 %1682
    %1684 = vset.pattern.permute.xlu0 0
    %1685 = vperm.xlu0 %1684, %v1590
    %v1686 = vpop.permute.xlu0 %1685
    %1687 = vset.pattern.permute.xlu0 0
    %1688 = vperm.xlu0 %1687, %v1591
    %v1689 = vpop.permute.xlu0 %1688
    %1690 = vset.pattern.permute.xlu0 0
    %1691 = vperm.xlu0 %1690, %v1592
    %v1692 = vpop.permute.xlu0 %1691
    %1693 = vset.pattern.permute.xlu0 0
    %1694 = vperm.xlu0 %1693, %v1593
    %v1695 = vpop.permute.xlu0 %1694
    %1696 = vset.pattern.permute.xlu0 0
    %1697 = vperm.xlu0 %1696, %v1594
    %v1698 = vpop.permute.xlu0 %1697
    %1699 = vset.pattern.permute.xlu0 0
    %1700 = vperm.xlu0 %1699, %v1595
    %v1701 = vpop.permute.xlu0 %1700
    %1702 = vset.pattern.permute.xlu0 0
    %1703 = vperm.xlu0 %1702, %v1596
    %v1704 = vpop.permute.xlu0 %1703
    %1705 = vset.pattern.permute.xlu0 0
    %1706 = vperm.xlu0 %1705, %v1597
    %v1707 = vpop.permute.xlu0 %1706
    %1708 = vset.pattern.permute.xlu0 0
    %1709 = vperm.xlu0 %1708, %v1598
    %v1710 = vpop.permute.xlu0 %1709
    %1711 = vset.pattern.permute.xlu0 0
    %1712 = vperm.xlu0 %1711, %v1599
    %v1713 = vpop.permute.xlu0 %1712
    %1714 = vset.pattern.permute.xlu0 0
    %1715 = vperm.xlu0 %1714, %v1600
    %v1716 = vpop.permute.xlu0 %1715
    %1717 = vset.pattern.permute.xlu0 0
    %1718 = vperm.xlu0 %1717, %v1601
    %v1719 = vpop.permute.xlu0 %1718
    %1720 = vset.pattern.permute.xlu0 0
    %1721 = vperm.xlu0 %1720, %v1602
    %v1722 = vpop.permute.xlu0 %1721
    %1723 = vset.pattern.permute.xlu0 0
    %1724 = vperm.xlu0 %1723, %v1603
    %v1725 = vpop.permute.xlu0 %1724
    %1726 = vset.pattern.permute.xlu0 0
    %1727 = vperm.xlu0 %1726, %v1604
    %v1728 = vpop.permute.xlu0 %1727
    %1729 = vset.pattern.permute.xlu0 0
    %1730 = vperm.xlu0 %1729, %v1605
    %v1731 = vpop.permute.xlu0 %1730
    %1732 = vset.pattern.permute.xlu0 0
    %1733 = vperm.xlu0 %1732, %v1606
    %v1734 = vpop.permute.xlu0 %1733
    %1735 = vset.pattern.permute.xlu0 0
    %1736 = vperm.xlu0 %1735, %v1607
    %v1737 = vpop.permute.xlu0 %1736
    %1738 = vset.pattern.permute.xlu0 0
    %1739 = vperm.xlu0 %1738, %v1608
    %v1740 = vpop.permute.xlu0 %1739
    %1741 = vset.pattern.permute.xlu0 0
    %1742 = vperm.xlu0 %1741, %v1609
    %v1743 = vpop.permute.xlu0 %1742
    %1744 = vset.pattern.permute.xlu0 0
    %1745 = vperm.xlu0 %1744, %v1610
    %v1746 = vpop.permute.xlu0 %1745
    %1747 = vset.pattern.permute.xlu0 0
    %1748 = vperm.xlu0 %1747, %v1611
    %v1749 = vpop.permute.xlu0 %1748
    %1750 = vset.pattern.permute.xlu0 0
    %1751 = vperm.xlu0 %1750, %v1612
    %v1752 = vpop.permute.xlu0 %1751
    %1753 = vset.pattern.permute.xlu0 0
    %1754 = vperm.xlu0 %1753, %v1613
    %v1755 = vpop.permute.xlu0 %1754
    %1756 = vset.pattern.permute.xlu0 0
    %1757 = vperm.xlu0 %1756, %v1614
    %v1758 = vpop.permute.xlu0 %1757
    %1759 = vset.pattern.permute.xlu0 0
    %1760 = vperm.xlu0 %1759, %v1615
    %v1761 = vpop.permute.xlu0 %1760
    %1762 = vset.pattern.permute.xlu0 0
    %1763 = vperm.xlu0 %1762, %v1616
    %v1764 = vpop.permute.xlu0 %1763
    %1765 = vset.pattern.permute.xlu0 0
    %1766 = vperm.xlu0 %1765, %v1617
    %v1767 = vpop.permute.xlu0 %1766
    %1768 = vset.pattern.permute.xlu0 0
    %1769 = vperm.xlu0 %1768, %v1618
    %v1770 = vpop.permute.xlu0 %1769
    %1771 = vset.pattern.permute.xlu0 0
    %1772 = vperm.xlu0 %1771, %v1619
    %v1773 = vpop.permute.xlu0 %1772
    %1774 = vset.pattern.permute.xlu0 0
    %1775 = vperm.xlu0 %1774, %v1620
    %v1776 = vpop.permute.xlu0 %1775
    %1777 = vset.pattern.permute.xlu0 0
    %1778 = vperm.xlu0 %1777, %v1621
    %v1779 = vpop.permute.xlu0 %1778
    %1780 = vset.pattern.permute.xlu0 0
    %1781 = vperm.xlu0 %1780, %v1622
    %v1782 = vpop.permute.xlu0 %1781
    %1783 = vset.pattern.permute.xlu0 0
    %1784 = vperm.xlu0 %1783, %v1623
    %v1785 = vpop.permute.xlu0 %1784
    %1786 = vset.pattern.permute.xlu0 0
    %1787 = vperm.xlu0 %1786, %v1624
    %v1788 = vpop.permute.xlu0 %1787
    %1789 = vset.pattern.permute.xlu0 0
    %1790 = vperm.xlu0 %1789, %v1625
    %v1791 = vpop.permute.xlu0 %1790
    %1792 = vset.pattern.permute.xlu0 0
    %1793 = vperm.xlu0 %1792, %v1626
    %v1794 = vpop.permute.xlu0 %1793
    %1795 = vset.pattern.permute.xlu0 0
    %1796 = vperm.xlu0 %1795, %v1627
    %v1797 = vpop.permute.xlu0 %1796
    %1798 = vset.pattern.permute.xlu0 0
    %1799 = vperm.xlu0 %1798, %v1628
    %v1800 = vpop.permute.xlu0 %1799
    %1801 = vset.pattern.permute.xlu0 0
    %1802 = vperm.xlu0 %1801, %v1629
    %v1803 = vpop.permute.xlu0 %1802
    %1804 = vset.pattern.permute.xlu0 0
    %1805 = vperm.xlu0 %1804, %v1630
    %v1806 = vpop.permute.xlu0 %1805
    %1807 = vset.pattern.permute.xlu0 0
    %1808 = vperm.xlu0 %1807, %v1631
    %v1809 = vpop.permute.xlu0 %1808
    %1810 = vset.pattern.permute.xlu0 0
    %1811 = vperm.xlu0 %1810, %v1632
    %v1812 = vpop.permute.xlu0 %1811
    %1813 = vset.pattern.permute.xlu0 0
    %1814 = vperm.xlu0 %1813, %v1633
    %v1815 = vpop.permute.xlu0 %1814
    %1816 = vset.pattern.permute.xlu0 0
    %1817 = vperm.xlu0 %1816, %v1634
    %v1818 = vpop.permute.xlu0 %1817
    %1819 = vset.pattern.permute.xlu0 0
    %1820 = vperm.xlu0 %1819, %v1635
    %v1821 = vpop.permute.xlu0 %1820
    %1822 = vset.pattern.permute.xlu0 0
    %1823 = vperm.xlu0 %1822, %v1636
    %v1824 = vpop.permute.xlu0 %1823
    %1825 = vset.pattern.permute.xlu0 0
    %1826 = vperm.xlu0 %1825, %v1637
    %v1827 = vpop.permute.xlu0 %1826
    %1828 = vset.pattern.permute.xlu0 0
    %1829 = vperm.xlu0 %1828, %v1638
    %v1830 = vpop.permute.xlu0 %1829
    %vm1831 = vcmp.eq.s32.totalorder %v1641, 1
    %vm1832 = vcmp.eq.s32.totalorder %v1644, 1
    %vm1833 = vcmp.eq.s32.totalorder %v1647, 1
    %vm1834 = vcmp.eq.s32.totalorder %v1650, 1
    %vm1835 = vcmp.eq.s32.totalorder %v1653, 1
    %vm1836 = vcmp.eq.s32.totalorder %v1656, 1
    %vm1837 = vcmp.eq.s32.totalorder %v1659, 1
    %vm1838 = vcmp.eq.s32.totalorder %v1662, 1
    %vm1839 = vcmp.eq.s32.totalorder %v1665, 1
    %vm1840 = vcmp.eq.s32.totalorder %v1668, 1
    %vm1841 = vcmp.eq.s32.totalorder %v1671, 1
    %vm1842 = vcmp.eq.s32.totalorder %v1674, 1
    %vm1843 = vcmp.eq.s32.totalorder %v1677, 1
    %vm1844 = vcmp.eq.s32.totalorder %v1680, 1
    %vm1845 = vcmp.eq.s32.totalorder %v1683, 1
    %vm1846 = vcmp.eq.s32.totalorder %v1686, 1
    %vm1847 = vcmp.eq.s32.totalorder %v1689, 1
    %vm1848 = vcmp.eq.s32.totalorder %v1692, 1
    %vm1849 = vcmp.eq.s32.totalorder %v1695, 1
    %vm1850 = vcmp.eq.s32.totalorder %v1698, 1
    %vm1851 = vcmp.eq.s32.totalorder %v1701, 1
    %vm1852 = vcmp.eq.s32.totalorder %v1704, 1
    %vm1853 = vcmp.eq.s32.totalorder %v1707, 1
    %vm1854 = vcmp.eq.s32.totalorder %v1710, 1
    %vm1855 = vcmp.eq.s32.totalorder %v1713, 1
    %vm1856 = vcmp.eq.s32.totalorder %v1716, 1
    %vm1857 = vcmp.eq.s32.totalorder %v1719, 1
    %vm1858 = vcmp.eq.s32.totalorder %v1722, 1
    %vm1859 = vcmp.eq.s32.totalorder %v1725, 1
    %vm1860 = vcmp.eq.s32.totalorder %v1728, 1
    %vm1861 = vcmp.eq.s32.totalorder %v1731, 1
    %vm1862 = vcmp.eq.s32.totalorder %v1734, 1
    %vm1863 = vcmp.eq.s32.totalorder %v1737, 1
    %vm1864 = vcmp.eq.s32.totalorder %v1740, 1
    %vm1865 = vcmp.eq.s32.totalorder %v1743, 1
    %vm1866 = vcmp.eq.s32.totalorder %v1746, 1
    %vm1867 = vcmp.eq.s32.totalorder %v1749, 1
    %vm1868 = vcmp.eq.s32.totalorder %v1752, 1
    %vm1869 = vcmp.eq.s32.totalorder %v1755, 1
    %vm1870 = vcmp.eq.s32.totalorder %v1758, 1
    %vm1871 = vcmp.eq.s32.totalorder %v1761, 1
    %vm1872 = vcmp.eq.s32.totalorder %v1764, 1
    %vm1873 = vcmp.eq.s32.totalorder %v1767, 1
    %vm1874 = vcmp.eq.s32.totalorder %v1770, 1
    %vm1875 = vcmp.eq.s32.totalorder %v1773, 1
    %vm1876 = vcmp.eq.s32.totalorder %v1776, 1
    %vm1877 = vcmp.eq.s32.totalorder %v1779, 1
    %vm1878 = vcmp.eq.s32.totalorder %v1782, 1
    %vm1879 = vcmp.eq.s32.totalorder %v1785, 1
    %vm1880 = vcmp.eq.s32.totalorder %v1788, 1
    %vm1881 = vcmp.eq.s32.totalorder %v1791, 1
    %vm1882 = vcmp.eq.s32.totalorder %v1794, 1
    %vm1883 = vcmp.eq.s32.totalorder %v1797, 1
    %vm1884 = vcmp.eq.s32.totalorder %v1800, 1
    %vm1885 = vcmp.eq.s32.totalorder %v1803, 1
    %vm1886 = vcmp.eq.s32.totalorder %v1806, 1
    %vm1887 = vcmp.eq.s32.totalorder %v1809, 1
    %vm1888 = vcmp.eq.s32.totalorder %v1812, 1
    %vm1889 = vcmp.eq.s32.totalorder %v1815, 1
    %vm1890 = vcmp.eq.s32.totalorder %v1818, 1
    %vm1891 = vcmp.eq.s32.totalorder %v1821, 1
    %vm1892 = vcmp.eq.s32.totalorder %v1824, 1
    %vm1893 = vcmp.eq.s32.totalorder %v1827, 1
    %vm1894 = vcmp.eq.s32.totalorder %v1830, 1
    %v1895 = vsel %vm1831, %v634, -inf
    %v1896 = vsel %vm1832, %v639, -inf
    %v1897 = vsel %vm1833, %v644, -inf
    %v1898 = vsel %vm1834, %v649, -inf
    %v1899 = vsel %vm1835, %v654, -inf
    %v1900 = vsel %vm1836, %v659, -inf
    %v1901 = vsel %vm1837, %v664, -inf
    %v1902 = vsel %vm1838, %v669, -inf
    %v1903 = vsel %vm1839, %v763, -inf
    %v1904 = vsel %vm1840, %v768, -inf
    %v1905 = vsel %vm1841, %v773, -inf
    %v1906 = vsel %vm1842, %v778, -inf
    %v1907 = vsel %vm1843, %v783, -inf
    %v1908 = vsel %vm1844, %v788, -inf
    %v1909 = vsel %vm1845, %v793, -inf
    %v1910 = vsel %vm1846, %v798, -inf
    %v1911 = vsel %vm1847, %v892, -inf
    %v1912 = vsel %vm1848, %v897, -inf
    %v1913 = vsel %vm1849, %v902, -inf
    %v1914 = vsel %vm1850, %v907, -inf
    %v1915 = vsel %vm1851, %v912, -inf
    %v1916 = vsel %vm1852, %v917, -inf
    %v1917 = vsel %vm1853, %v922, -inf
    %v1918 = vsel %vm1854, %v927, -inf
    %v1919 = vsel %vm1855, %v1021, -inf
    %v1920 = vsel %vm1856, %v1026, -inf
    %v1921 = vsel %vm1857, %v1031, -inf
    %v1922 = vsel %vm1858, %v1036, -inf
    %v1923 = vsel %vm1859, %v1041, -inf
    %v1924 = vsel %vm1860, %v1046, -inf
    %v1925 = vsel %vm1861, %v1051, -inf
    %v1926 = vsel %vm1862, %v1056, -inf
    %v1927 = vsel %vm1863, %v1150, -inf
    %v1928 = vsel %vm1864, %v1155, -inf
    %v1929 = vsel %vm1865, %v1160, -inf
    %v1930 = vsel %vm1866, %v1165, -inf
    %v1931 = vsel %vm1867, %v1170, -inf
    %v1932 = vsel %vm1868, %v1175, -inf
    %v1933 = vsel %vm1869, %v1180, -inf
    %v1934 = vsel %vm1870, %v1185, -inf
    %v1935 = vsel %vm1871, %v1279, -inf
    %v1936 = vsel %vm1872, %v1284, -inf
    %v1937 = vsel %vm1873, %v1289, -inf
    %v1938 = vsel %vm1874, %v1294, -inf
    %v1939 = vsel %vm1875, %v1299, -inf
    %v1940 = vsel %vm1876, %v1304, -inf
    %v1941 = vsel %vm1877, %v1309, -inf
    %v1942 = vsel %vm1878, %v1314, -inf
    %v1943 = vsel %vm1879, %v1408, -inf
    %v1944 = vsel %vm1880, %v1413, -inf
    %v1945 = vsel %vm1881, %v1418, -inf
    %v1946 = vsel %vm1882, %v1423, -inf
    %v1947 = vsel %vm1883, %v1428, -inf
    %v1948 = vsel %vm1884, %v1433, -inf
    %v1949 = vsel %vm1885, %v1438, -inf
    %v1950 = vsel %vm1886, %v1443, -inf
    %v1951 = vsel %vm1887, %v1537, -inf
    %v1952 = vsel %vm1888, %v1542, -inf
    %v1953 = vsel %vm1889, %v1547, -inf
    %v1954 = vsel %vm1890, %v1552, -inf
    %v1955 = vsel %vm1891, %v1557, -inf
    %v1956 = vsel %vm1892, %v1562, -inf
    %v1957 = vsel %vm1893, %v1567, -inf
    %v1958 = vsel %vm1894, %v1572, -inf
    %v1959 = vmax.f32 %v12, %v1895
    %v1960 = vmax.f32 %v13, %v1896
    %v1961 = vmax.f32 %v14, %v1903
    %v1962 = vmax.f32 %v15, %v1904
    %v1963 = vmax.f32 %v16, %v1911
    %v1964 = vmax.f32 %v17, %v1912
    %v1965 = vmax.f32 %v18, %v1919
    %v1966 = vmax.f32 %v19, %v1920
    %v1967 = vmax.f32 %v20, %v1927
    %v1968 = vmax.f32 %v21, %v1928
    %v1969 = vmax.f32 %v22, %v1935
    %v1970 = vmax.f32 %v23, %v1936
    %v1971 = vmax.f32 %v24, %v1943
    %v1972 = vmax.f32 %v25, %v1944
    %v1973 = vmax.f32 %v26, %v1951
    %v1974 = vmax.f32 %v27, %v1952
    %v1975 = vmax.f32 %v1959, %v1897
    %v1976 = vmax.f32 %v1960, %v1898
    %v1977 = vmax.f32 %v1961, %v1905
    %v1978 = vmax.f32 %v1962, %v1906
    %v1979 = vmax.f32 %v1963, %v1913
    %v1980 = vmax.f32 %v1964, %v1914
    %v1981 = vmax.f32 %v1965, %v1921
    %v1982 = vmax.f32 %v1966, %v1922
    %v1983 = vmax.f32 %v1967, %v1929
    %v1984 = vmax.f32 %v1968, %v1930
    %v1985 = vmax.f32 %v1969, %v1937
    %v1986 = vmax.f32 %v1970, %v1938
    %v1987 = vmax.f32 %v1971, %v1945
    %v1988 = vmax.f32 %v1972, %v1946
    %v1989 = vmax.f32 %v1973, %v1953
    %v1990 = vmax.f32 %v1974, %v1954
    %vm1991 = vmor %vm92, %vm94
    %vm1992 = vmor %vm93, %vm95
    %vm1993 = vmor %vm100, %vm102
    %vm1994 = vmor %vm101, %vm103
    %vm1995 = vmor %vm108, %vm110
    %vm1996 = vmor %vm109, %vm111
    %vm1997 = vmor %vm116, %vm118
    %vm1998 = vmor %vm117, %vm119
    %vm1999 = vmor %vm124, %vm126
    %vm2000 = vmor %vm125, %vm127
    %vm2001 = vmor %vm132, %vm134
    %vm2002 = vmor %vm133, %vm135
    %vm2003 = vmor %vm140, %vm142
    %vm2004 = vmor %vm141, %vm143
    %vm2005 = vmor %vm148, %vm150
    %vm2006 = vmor %vm149, %vm151
    %v2007 = vmax.f32 %v1975, %v1899
    %v2008 = vmax.f32 %v1976, %v1900
    %v2009 = vmax.f32 %v1977, %v1907
    %v2010 = vmax.f32 %v1978, %v1908
    %v2011 = vmax.f32 %v1979, %v1915
    %v2012 = vmax.f32 %v1980, %v1916
    %v2013 = vmax.f32 %v1981, %v1923
    %v2014 = vmax.f32 %v1982, %v1924
    %v2015 = vmax.f32 %v1983, %v1931
    %v2016 = vmax.f32 %v1984, %v1932
    %v2017 = vmax.f32 %v1985, %v1939
    %v2018 = vmax.f32 %v1986, %v1940
    %v2019 = vmax.f32 %v1987, %v1947
    %v2020 = vmax.f32 %v1988, %v1948
    %v2021 = vmax.f32 %v1989, %v1955
    %v2022 = vmax.f32 %v1990, %v1956
    %vm2023 = vmor %vm1991, %vm96
    %vm2024 = vmor %vm1992, %vm97
    %vm2025 = vmor %vm1993, %vm104
    %vm2026 = vmor %vm1994, %vm105
    %vm2027 = vmor %vm1995, %vm112
    %vm2028 = vmor %vm1996, %vm113
    %vm2029 = vmor %vm1997, %vm120
    %vm2030 = vmor %vm1998, %vm121
    %vm2031 = vmor %vm1999, %vm128
    %vm2032 = vmor %vm2000, %vm129
    %vm2033 = vmor %vm2001, %vm136
    %vm2034 = vmor %vm2002, %vm137
    %vm2035 = vmor %vm2003, %vm144
    %vm2036 = vmor %vm2004, %vm145
    %vm2037 = vmor %vm2005, %vm152
    %vm2038 = vmor %vm2006, %vm153
    %v2039 = vmax.f32 %v2007, %v1901
    %v2040 = vmax.f32 %v2008, %v1902
    %v2041 = vmax.f32 %v2009, %v1909
    %v2042 = vmax.f32 %v2010, %v1910
    %v2043 = vmax.f32 %v2011, %v1917
    %v2044 = vmax.f32 %v2012, %v1918
    %v2045 = vmax.f32 %v2013, %v1925
    %v2046 = vmax.f32 %v2014, %v1926
    %v2047 = vmax.f32 %v2015, %v1933
    %v2048 = vmax.f32 %v2016, %v1934
    %v2049 = vmax.f32 %v2017, %v1941
    %v2050 = vmax.f32 %v2018, %v1942
    %v2051 = vmax.f32 %v2019, %v1949
    %v2052 = vmax.f32 %v2020, %v1950
    %v2053 = vmax.f32 %v2021, %v1957
    %v2054 = vmax.f32 %v2022, %v1958
    %vm2055 = vmor %vm2023, %vm98
    %vm2056 = vmor %vm2024, %vm99
    %vm2057 = vmor %vm2025, %vm106
    %vm2058 = vmor %vm2026, %vm107
    %vm2059 = vmor %vm2027, %vm114
    %vm2060 = vmor %vm2028, %vm115
    %vm2061 = vmor %vm2029, %vm122
    %vm2062 = vmor %vm2030, %vm123
    %vm2063 = vmor %vm2031, %vm130
    %vm2064 = vmor %vm2032, %vm131
    %vm2065 = vmor %vm2033, %vm138
    %vm2066 = vmor %vm2034, %vm139
    %vm2067 = vmor %vm2035, %vm146
    %vm2068 = vmor %vm2036, %vm147
    %vm2069 = vmor %vm2037, %vm154
    %vm2070 = vmor %vm2038, %vm155
    %v2071 = vsel %vm2055, 1, 0
    %v2072 = vsel %vm2056, 1, 0
    %v2073 = vsel %vm2057, 1, 0
    %v2074 = vsel %vm2058, 1, 0
    %v2075 = vsel %vm2059, 1, 0
    %v2076 = vsel %vm2060, 1, 0
    %v2077 = vsel %vm2061, 1, 0
    %v2078 = vsel %vm2062, 1, 0
    %v2079 = vsel %vm2063, 1, 0
    %v2080 = vsel %vm2064, 1, 0
    %v2081 = vsel %vm2065, 1, 0
    %v2082 = vsel %vm2066, 1, 0
    %v2083 = vsel %vm2067, 1, 0
    %v2084 = vsel %vm2068, 1, 0
    %v2085 = vsel %vm2069, 1, 0
    %v2086 = vsel %vm2070, 1, 0
    %2087 = vset.pattern.permute.xlu0 0
    %2088 = vperm.xlu0 %2087, %v2071
    %v2089 = vpop.permute.xlu0 %2088
    %2090 = vset.pattern.permute.xlu0 0
    %2091 = vperm.xlu0 %2090, %v2072
    %v2092 = vpop.permute.xlu0 %2091
    %2093 = vset.pattern.permute.xlu0 0
    %2094 = vperm.xlu0 %2093, %v2073
    %v2095 = vpop.permute.xlu0 %2094
    %2096 = vset.pattern.permute.xlu0 0
    %2097 = vperm.xlu0 %2096, %v2074
    %v2098 = vpop.permute.xlu0 %2097
    %2099 = vset.pattern.permute.xlu0 0
    %2100 = vperm.xlu0 %2099, %v2075
    %v2101 = vpop.permute.xlu0 %2100
    %2102 = vset.pattern.permute.xlu0 0
    %2103 = vperm.xlu0 %2102, %v2076
    %v2104 = vpop.permute.xlu0 %2103
    %2105 = vset.pattern.permute.xlu0 0
    %2106 = vperm.xlu0 %2105, %v2077
    %v2107 = vpop.permute.xlu0 %2106
    %2108 = vset.pattern.permute.xlu0 0
    %2109 = vperm.xlu0 %2108, %v2078
    %v2110 = vpop.permute.xlu0 %2109
    %2111 = vset.pattern.permute.xlu0 0
    %2112 = vperm.xlu0 %2111, %v2079
    %v2113 = vpop.permute.xlu0 %2112
    %2114 = vset.pattern.permute.xlu0 0
    %2115 = vperm.xlu0 %2114, %v2080
    %v2116 = vpop.permute.xlu0 %2115
    %2117 = vset.pattern.permute.xlu0 0
    %2118 = vperm.xlu0 %2117, %v2081
    %v2119 = vpop.permute.xlu0 %2118
    %2120 = vset.pattern.permute.xlu0 0
    %2121 = vperm.xlu0 %2120, %v2082
    %v2122 = vpop.permute.xlu0 %2121
    %2123 = vset.pattern.permute.xlu0 0
    %2124 = vperm.xlu0 %2123, %v2083
    %v2125 = vpop.permute.xlu0 %2124
    %2126 = vset.pattern.permute.xlu0 0
    %2127 = vperm.xlu0 %2126, %v2084
    %v2128 = vpop.permute.xlu0 %2127
    %2129 = vset.pattern.permute.xlu0 0
    %2130 = vperm.xlu0 %2129, %v2085
    %v2131 = vpop.permute.xlu0 %2130
    %2132 = vset.pattern.permute.xlu0 0
    %2133 = vperm.xlu0 %2132, %v2086
    %v2134 = vpop.permute.xlu0 %2133
    %vm2135 = vcmp.eq.s32.totalorder %v2089, 1
    %vm2136 = vcmp.eq.s32.totalorder %v2092, 1
    %vm2137 = vcmp.eq.s32.totalorder %v2095, 1
    %vm2138 = vcmp.eq.s32.totalorder %v2098, 1
    %vm2139 = vcmp.eq.s32.totalorder %v2101, 1
    %vm2140 = vcmp.eq.s32.totalorder %v2104, 1
    %vm2141 = vcmp.eq.s32.totalorder %v2107, 1
    %vm2142 = vcmp.eq.s32.totalorder %v2110, 1
    %vm2143 = vcmp.eq.s32.totalorder %v2113, 1
    %vm2144 = vcmp.eq.s32.totalorder %v2116, 1
    %vm2145 = vcmp.eq.s32.totalorder %v2119, 1
    %vm2146 = vcmp.eq.s32.totalorder %v2122, 1
    %vm2147 = vcmp.eq.s32.totalorder %v2125, 1
    %vm2148 = vcmp.eq.s32.totalorder %v2128, 1
    %vm2149 = vcmp.eq.s32.totalorder %v2131, 1
    %vm2150 = vcmp.eq.s32.totalorder %v2134, 1
    %v2151 = vsel %vm2135, %v2039, 0.0
    %v2152 = vsel %vm2136, %v2040, 0.0
    %v2153 = vsel %vm2137, %v2041, 0.0
    %v2154 = vsel %vm2138, %v2042, 0.0
    %v2155 = vsel %vm2139, %v2043, 0.0
    %v2156 = vsel %vm2140, %v2044, 0.0
    %v2157 = vsel %vm2141, %v2045, 0.0
    %v2158 = vsel %vm2142, %v2046, 0.0
    %v2159 = vsel %vm2143, %v2047, 0.0
    %v2160 = vsel %vm2144, %v2048, 0.0
    %v2161 = vsel %vm2145, %v2049, 0.0
    %v2162 = vsel %vm2146, %v2050, 0.0
    %v2163 = vsel %vm2147, %v2051, 0.0
    %v2164 = vsel %vm2148, %v2052, 0.0
    %v2165 = vsel %vm2149, %v2053, 0.0
    %v2166 = vsel %vm2150, %v2054, 0.0
    %vm2167 = vcmask 261120
    %2168 = vst.msk [vmem:[#allocation2] sm:$0xff] %vm2167, %v2151
    %2169 = vst.msk [vmem:[#allocation2 + $0x8] sm:$0xff] %vm2167, %v2152
    %2170 = vst.msk [vmem:[#allocation2 + $0x10] sm:$0xff] %vm2167, %v2153
    %2171 = vst.msk [vmem:[#allocation2 + $0x18] sm:$0xff] %vm2167, %v2154
    %2172 = vst.msk [vmem:[#allocation2 + $0x20] sm:$0xff] %vm2167, %v2155
    %2173 = vst.msk [vmem:[#allocation2 + $0x28] sm:$0xff] %vm2167, %v2156
    %2174 = vst.msk [vmem:[#allocation2 + $0x30] sm:$0xff] %vm2167, %v2157
    %2175 = vst.msk [vmem:[#allocation2 + $0x38] sm:$0xff] %vm2167, %v2158
    %2176 = vst.msk [vmem:[#allocation2 + $0x40] sm:$0xff] %vm2167, %v2159
    %2177 = vst.msk [vmem:[#allocation2 + $0x48] sm:$0xff] %vm2167, %v2160
    %2178 = vst.msk [vmem:[#allocation2 + $0x50] sm:$0xff] %vm2167, %v2161
    %2179 = vst.msk [vmem:[#allocation2 + $0x58] sm:$0xff] %vm2167, %v2162
    %2180 = vst.msk [vmem:[#allocation2 + $0x60] sm:$0xff] %vm2167, %v2163
    %2181 = vst.msk [vmem:[#allocation2 + $0x68] sm:$0xff] %vm2167, %v2164
    %2182 = vst.msk [vmem:[#allocation2 + $0x70] sm:$0xff] %vm2167, %v2165
    %2183 = vst.msk [vmem:[#allocation2 + $0x78] sm:$0xff] %vm2167, %v2166
    // Predicated region
    $region10: #{tpu_custom_call.1} parent=1 // pred_check
      _
    $region11: #{tpu_custom_call.1} parent=1 // pred_check_branch
      %2185 = sbr.rel (0) target = $region13
    $region12: #{tpu_custom_call.1} parent=1 // pred_region
      %s2187 = ssub.s32 2048, 2048
      %2188 = vsyncadd [#allocation3], %s2187
      %s2189 = sshll.u32 [#allocation2], 4
      %s2190 = int_to_ptr.vmem [resolvable:$true] %s2189
      %2195 = dma.vmem_to_hbm [thread:$0]  %s2190, 2048, %s2, [#allocation3], 128, 128, 8
    $region13: #{tpu_custom_call.1} parent=1 // pred_fallthru
      _
    // Predicated region
    $region14: #{tpu_custom_call.1} parent=1 // pred_check
      _
    $region15: #{tpu_custom_call.1} parent=1 // pred_check_branch
      %2197 = sbr.rel (0) target = $region17
    $region16: #{tpu_custom_call.1} parent=1 // pred_region
      %2198 = dma.done [#allocation3], 2048
    $region17: #{tpu_custom_call.1} parent=1 // pred_fallthru
      _
    %2199 = vsyncpa [#allocation3], 1

</llo_original>
